<compile_context>
chip_gen: v6e
topology: v6e:2x2x1
jax: 0.10.0
libtpu: 0.0.40
codegen_flags: <defaults>
</compile_context>

<pallas_src>
import math
import functools

import jax
import jax.numpy as jnp
import numpy as np
from jax.experimental import pallas as pl
from jax.experimental.pallas import tpu as pltpu

EPS = 1e-12  # TF-style LayerNorm epsilon (inside the sqrt)


# ----------------------------- in-kernel helpers -----------------------------
def _layernorm(x, gamma, beta):
    # x: (rows, D); gamma/beta: (1, D); all f32
    u = jnp.mean(x, axis=-1, keepdims=True)
    d = x - u
    s = jnp.mean(d * d, axis=-1, keepdims=True)
    return gamma * (d / jnp.sqrt(s + EPS)) + beta


def _gelu(x):
    # exact erf-based gelu (matches the reference `gelu`)
    return x * 0.5 * (1.0 + jax.lax.erf(x / math.sqrt(2.0)))


# --------------------------------- kernel ------------------------------------
def _make_encoder_kernel(half):
    """half = TB * Lf_pad: row offset splitting the stacked [Re; Im] spectrum."""

    def kernel(x_ref, cb_ref, ib_ref, ln0g_ref, ln0b_ref,
               wr_ref, wi_ref, ln1g_ref, ln1b_ref,
               w1_ref, b1_ref, w2_ref, b2_ref, ln2g_ref, ln2b_ref,
               out_ref, xc_ref):
        layer = pl.program_id(1)

        # Embedding LayerNorm once per batch tile; result carried in VMEM scratch.
        @pl.when(layer == 0)
        def _():
            xc_ref[...] = _layernorm(x_ref[...], ln0g_ref[...], ln0b_ref[...])

        x = xc_ref[...]                                    # (rows, D) f32

        # ---- FilterLayer: rfft -> complex multiply -> irfft, as 2 fused matmuls ----
        xf = jnp.dot(cb_ref[...], x.astype(jnp.bfloat16),
                     preferred_element_type=jnp.float32)   # (2*half, D): [Re; Im]
        xr = xf[:half]
        xi = xf[half:]
        wr = wr_ref[0]                                     # (half, D) f32
        wi = wi_ref[0]
        yr = xr * wr - xi * wi                             # complex multiply (f32 VPU)
        yi = xr * wi + xi * wr
        y = jnp.concatenate([yr, yi], axis=0).astype(jnp.bfloat16)
        filt = jnp.dot(ib_ref[...], y,
                       preferred_element_type=jnp.float32)  # (rows, D)
        # out_dropout: identity (eval mode)
        h = _layernorm(filt + x, ln1g_ref[0], ln1b_ref[0])

        # ---- Intermediate: dense(D->4D) -> gelu -> dense(4D->D) -> LN(residual) ----
        h1 = jnp.dot(h.astype(jnp.bfloat16), w1_ref[0],
                     preferred_element_type=jnp.float32) + b1_ref[0]
        h1 = _gelu(h1)
        h2 = jnp.dot(h1.astype(jnp.bfloat16), w2_ref[0],
                     preferred_element_type=jnp.float32) + b2_ref[0]
        # dropout: identity (eval mode)
        x_new = _layernorm(h2 + h, ln2g_ref[0], ln2b_ref[0])

        xc_ref[...] = x_new        # carry to next layer
        out_ref[...] = x_new       # resident output block; flushed when bt changes

    return kernel


# --------------------------------- wrapper -----------------------------------
def fmlp_encoder(x2d, cb, ib, ln0g, ln0b,
                 wr, wi, l1g, l1b, w1, b1, w2, b2, l2g, l2b, *, rows):
    """x2d: (B*L, D) f32 sequence embeddings (pre-LN).  rows = TB*L per grid step."""
    BL, D = x2d.shape
    n_bt = BL // rows
    nl = w1.shape[0]
    D4 = w1.shape[2]
    half = cb.shape[0] // 2

    def const_spec(arr):
        nd = arr.ndim
        return pl.BlockSpec(arr.shape, lambda bt, l, nd=nd: (0,) * nd)

    def per_layer(shape):
        return pl.BlockSpec((1,) + shape, lambda bt, l: (l, 0, 0))

    return pl.pallas_call(
        _make_encoder_kernel(half),
        out_shape=jax.ShapeDtypeStruct((BL, D), jnp.float32),
        grid=(n_bt, nl),
        in_specs=[
            pl.BlockSpec((rows, D), lambda bt, l: (bt, 0)),   # sequence embeddings
            const_spec(cb),                                    # forward DFT basis (bf16)
            const_spec(ib),                                    # inverse DFT basis (bf16)
            const_spec(ln0g), const_spec(ln0b),                # embedding LN
            per_layer((half, D)), per_layer((half, D)),        # filter weight Re / Im
            per_layer((1, D)), per_layer((1, D)),              # filter LN gamma / beta
            per_layer((D, D4)), per_layer((1, D4)),            # dense_1 W (bf16), b
            per_layer((D4, D)), per_layer((1, D)),             # dense_2 W (bf16), b
            per_layer((1, D)), per_layer((1, D)),              # intermediate LN
        ],
        out_specs=pl.BlockSpec((rows, D), lambda bt, l: (bt, 0)),
        scratch_shapes=[pltpu.VMEM((rows, D), jnp.float32)],   # activation carry
        compiler_params=pltpu.CompilerParams(
            dimension_semantics=("parallel", "arbitrary"),
            vmem_limit_bytes=32 * 1024 * 1024),
    )(x2d, cb, ib, ln0g, ln0b, wr, wi, l1g, l1b, w1, b1, w2, b2, l2g, l2b)


def pick_batch_tile(B, L, target_rows=256):
    """Sub-batch size TB per grid step (rows = TB*L).  Prefer large batch-stacked
    tiles, but keep >=2 steps on the parallel axis when B allows (v7x megacore)."""
    tb = max(1, min(B, max(1, target_rows // max(L, 1))))
    while B % tb:
        tb -= 1
    if B >= 2 and B // tb < 2:
        tb = max(1, B // 2)
        while B % tb:
            tb -= 1
    return tb


# ------------------------------ parameter setup -------------------------------
def init_params(key, item_num, max_len, emb_dim, num_layers, init_range=0.02):
    D, L = emb_dim, max_len
    Lf = L // 2 + 1
    keys = jax.random.split(key, 2 + 3 * num_layers)
    item_emb = init_range * jax.random.normal(keys[0], (item_num + 1, D), jnp.float32)
    item_emb = item_emb.at[0].set(0.0)  # padding_idx=0
    params = {
        "item_emb": item_emb,
        "pos_emb": init_range * jax.random.normal(keys[1], (L, D), jnp.float32),
        "ln0_g": jnp.ones((D,), jnp.float32),
        "ln0_b": jnp.zeros((D,), jnp.float32),
        "layers": [],
    }
    for i in range(num_layers):
        k_cw, k_w1, k_w2 = keys[2 + 3 * i: 2 + 3 * (i + 1)]
        cw = 0.02 * jax.random.normal(k_cw, (Lf, D, 2), jnp.float32)
        params["layers"].append(dict(
            wr=cw[..., 0], wi=cw[..., 1],
            ln1_g=jnp.ones((D,), jnp.float32), ln1_b=jnp.zeros((D,), jnp.float32),
            w1=init_range * jax.random.normal(k_w1, (D, 4 * D), jnp.float32),
            b1=jnp.zeros((4 * D,), jnp.float32),
            w2=init_range * jax.random.normal(k_w2, (4 * D, D), jnp.float32),
            b2=jnp.zeros((D,), jnp.float32),
            ln2_g=jnp.ones((D,), jnp.float32), ln2_b=jnp.zeros((D,), jnp.float32),
        ))
    return params


def prepare_kernel_operands(params, L, tb):
    """DFT bases (exact rfft/irfft, norm='ortho', as block-diagonal real matmuls) and
    per-layer parameters stacked along a leading num_layers axis."""
    D = params["item_emb"].shape[1]
    Lf = L // 2 + 1
    Lfp = ((Lf + 7) // 8) * 8           # pad frequency axis to a sublane multiple

    eye = np.eye(L, dtype=np.float64)
    F = np.fft.rfft(eye, axis=0, norm="ortho")                 # (Lf, L) complex
    Cr = np.zeros((Lfp, L)); Cr[:Lf] = F.real
    Ci = np.zeros((Lfp, L)); Ci[:Lf] = F.imag
    eyeF = np.eye(Lf, dtype=np.complex128)
    IR = np.zeros((L, Lfp)); IR[:, :Lf] = np.fft.irfft(eyeF, n=L, axis=0, norm="ortho")
    II = np.zeros((L, Lfp)); II[:, :Lf] = np.fft.irfft(1j * eyeF, n=L, axis=0, norm="ortho")
    eye_tb = np.eye(tb)
    cb = np.concatenate([np.kron(eye_tb, Cr), np.kron(eye_tb, Ci)], axis=0)  # (2*tb*Lfp, tb*L)
    ib = np.concatenate([np.kron(eye_tb, IR), np.kron(eye_tb, II)], axis=1)  # (tb*L, 2*tb*Lfp)
    cb = jnp.asarray(cb, jnp.bfloat16)
    ib = jnp.asarray(ib, jnp.bfloat16)

    ln0g = params["ln0_g"].reshape(1, D)
    ln0b = params["ln0_b"].reshape(1, D)

    def pad_tile(w):  # (Lf, D) -> (tb*Lfp, D), zero-padded freq rows, tiled per sub-batch
        wp = jnp.zeros((Lfp, D), jnp.float32).at[:Lf].set(w)
        return jnp.tile(wp, (tb, 1))

    layers = params["layers"]
    wr = jnp.stack([pad_tile(lp["wr"]) for lp in layers])
    wi = jnp.stack([pad_tile(lp["wi"]) for lp in layers])
    l1g = jnp.stack([lp["ln1_g"].reshape(1, D) for lp in layers])
    l1b = jnp.stack([lp["ln1_b"].reshape(1, D) for lp in layers])
    w1 = jnp.stack([lp["w1"] for lp in layers]).astype(jnp.bfloat16)
    b1 = jnp.stack([lp["b1"].reshape(1, 4 * D) for lp in layers])
    w2 = jnp.stack([lp["w2"] for lp in layers]).astype(jnp.bfloat16)
    b2 = jnp.stack([lp["b2"].reshape(1, D) for lp in layers])
    l2g = jnp.stack([lp["ln2_g"].reshape(1, D) for lp in layers])
    l2b = jnp.stack([lp["ln2_b"].reshape(1, D) for lp in layers])
    return (cb, ib, ln0g, ln0b, wr, wi, l1g, l1b, w1, b1, w2, b2, l2g, l2b)


# --------------------------------- forward ------------------------------------
@functools.partial(jax.jit, static_argnames=("rows",))
def fmlp_forward(input_ids, item_emb, pos_emb, operands, *, rows):
    B, L = input_ids.shape
    D = item_emb.shape[1]
    # Embedding gathers + positional add: XLA glue outside the kernel.
    seq_emb = jnp.take(item_emb, input_ids, axis=0) + pos_emb[None, :, :]   # (B, L, D)
    x2d = seq_emb.reshape(B * L, D)
    out2d = fmlp_encoder(x2d, *operands, rows=rows)
    return out2d.reshape(B, L, D)


# --------------------------- pure-JAX reference (check) -----------------------
def _ref_ln(x, g, b):
    u = jnp.mean(x, axis=-1, keepdims=True)
    s = jnp.mean((x - u) ** 2, axis=-1, keepdims=True)
    return g * ((x - u) / jnp.sqrt(s + EPS)) + b


def ref_forward(input_ids, params):
    B, L = input_ids.shape
    x = jnp.take(params["item_emb"], input_ids, axis=0) + params["pos_emb"][None, :, :]
    x = _ref_ln(x, params["ln0_g"], params["ln0_b"])
    for lp in params["layers"]:
        xf = jnp.fft.rfft(x, axis=1, norm="ortho")
        xf = xf * (lp["wr"] + 1j * lp["wi"])[None, :, :]
        filt = jnp.fft.irfft(xf, n=L, axis=1, norm="ortho")
        h = _ref_ln(filt + x, lp["ln1_g"], lp["ln1_b"])
        h1 = h @ lp["w1"] + lp["b1"]
        h1 = h1 * 0.5 * (1.0 + jax.lax.erf(h1 / math.sqrt(2.0)))
        h2 = h1 @ lp["w2"] + lp["b2"]
        x = _ref_ln(h2 + h, lp["ln2_g"], lp["ln2_b"])
    return x


# ----------------------------------- main -------------------------------------
if __name__ == "__main__":
    B, L, D = 2, 8, 32
    ITEM_NUM = 50
    NUM_LAYERS = 2

    key = jax.random.PRNGKey(0)
    k_ids, k_params = jax.random.split(key)
    input_ids = jax.random.randint(k_ids, (B, L), minval=0, maxval=ITEM_NUM + 1,
                                   dtype=jnp.int32)
    params = init_params(k_params, ITEM_NUM, L, D, NUM_LAYERS)

    tb = pick_batch_tile(B, L)
    operands = prepare_kernel_operands(params, L, tb)

    out = fmlp_forward(input_ids, params["item_emb"], params["pos_emb"],
                       operands, rows=tb * L)
    out = jax.block_until_ready(out)

    ref = jax.block_until_ready(ref_forward(input_ids, params))
    # bf16 MXU operands with f32 accumulation; LN/gelu/residuals in f32.
    np.testing.assert_allclose(np.asarray(out), np.asarray(ref), rtol=3e-3, atol=3e-3)

    print("KERNEL_OK")
</pallas_src>

<mosaic_0001>
module attributes {stable_mosaic.version = 11 : i64} {
  func.func @kernel(%arg0: i32, %arg1: i32, %arg2: memref<8x32xf32, #tpu.memory_space<vmem>>, %arg3: memref<16x8xbf16, #tpu.memory_space<vmem>>, %arg4: memref<8x16xbf16, #tpu.memory_space<vmem>>, %arg5: memref<1x32xf32, #tpu.memory_space<vmem>>, %arg6: memref<1x32xf32, #tpu.memory_space<vmem>>, %arg7: memref<1x8x32xf32, #tpu.memory_space<vmem>>, %arg8: memref<1x8x32xf32, #tpu.memory_space<vmem>>, %arg9: memref<1x1x32xf32, #tpu.memory_space<vmem>>, %arg10: memref<1x1x32xf32, #tpu.memory_space<vmem>>, %arg11: memref<1x32x128xbf16, #tpu.memory_space<vmem>>, %arg12: memref<1x1x128xf32, #tpu.memory_space<vmem>>, %arg13: memref<1x128x32xbf16, #tpu.memory_space<vmem>>, %arg14: memref<1x1x32xf32, #tpu.memory_space<vmem>>, %arg15: memref<1x1x32xf32, #tpu.memory_space<vmem>>, %arg16: memref<1x1x32xf32, #tpu.memory_space<vmem>>, %arg17: memref<8x32xf32, #tpu.memory_space<vmem>>, %arg18: memref<8x32xf32, #tpu.memory_space<vmem>>) attributes {dimension_semantics = [#tpu.dimension_semantics<parallel>, #tpu.dimension_semantics<arbitrary>], iteration_bounds = array<i64: 2, 2>, scalar_prefetch = 0 : i64, scratch_operands = 1 : i64, tpu.core_type = #tpu.core_type<tc>, window_params = [{transform_indices = @transform_0, window_bounds = array<i64: 8, 32>}, {pipeline_mode = #tpu.pipeline_mode<synchronous>, transform_indices = @transform_1, window_bounds = array<i64: 16, 8>}, {pipeline_mode = #tpu.pipeline_mode<synchronous>, transform_indices = @transform_2, window_bounds = array<i64: 8, 16>}, {pipeline_mode = #tpu.pipeline_mode<synchronous>, transform_indices = @transform_3, window_bounds = array<i64: 1, 32>}, {pipeline_mode = #tpu.pipeline_mode<synchronous>, transform_indices = @transform_4, window_bounds = array<i64: 1, 32>}, {transform_indices = @transform_5, window_bounds = array<i64: 1, 8, 32>}, {transform_indices = @transform_6, window_bounds = array<i64: 1, 8, 32>}, {transform_indices = @transform_7, window_bounds = array<i64: 1, 1, 32>}, {transform_indices = @transform_8, window_bounds = array<i64: 1, 1, 32>}, {transform_indices = @transform_9, window_bounds = array<i64: 1, 32, 128>}, {transform_indices = @transform_10, window_bounds = array<i64: 1, 1, 128>}, {transform_indices = @transform_11, window_bounds = array<i64: 1, 128, 32>}, {transform_indices = @transform_12, window_bounds = array<i64: 1, 1, 32>}, {transform_indices = @transform_13, window_bounds = array<i64: 1, 1, 32>}, {transform_indices = @transform_14, window_bounds = array<i64: 1, 1, 32>}, {transform_indices = @transform_15, window_bounds = array<i64: 8, 32>}]} {
    %c0_i32 = arith.constant 0 : i32
    %0 = arith.cmpi eq, %arg1, %c0_i32 : i32
    %1 = arith.extui %0 : i1 to i32
    %c0_i32_0 = arith.constant 0 : i32
    %2 = arith.cmpi ne, %1, %c0_i32_0 : i32
    scf.if %2 {
      %c0_56 = arith.constant 0 : index
      %c0_57 = arith.constant 0 : index
      %99 = vector.load %arg2[%c0_56, %c0_57] : memref<8x32xf32, #tpu.memory_space<vmem>>, vector<8x32xf32>
      %c0_58 = arith.constant 0 : index
      %c0_59 = arith.constant 0 : index
      %100 = vector.load %arg5[%c0_58, %c0_59] : memref<1x32xf32, #tpu.memory_space<vmem>>, vector<1x32xf32>
      %c0_60 = arith.constant 0 : index
      %c0_61 = arith.constant 0 : index
      %101 = vector.load %arg6[%c0_60, %c0_61] : memref<1x32xf32, #tpu.memory_space<vmem>>, vector<1x32xf32>
      %cst_62 = arith.constant dense<0.000000e+00> : vector<8xf32>
      %102 = vector.multi_reduction <add>, %99, %cst_62 [1] : vector<8x32xf32> to vector<8xf32>
      %103 = vector.shape_cast %102 : vector<8xf32> to vector<8x1xf32>
      %cst_63 = arith.constant 3.200000e+01 : f32
      %104 = vector.broadcast %cst_63 : f32 to vector<8x1xf32>
      %105 = arith.divf %103, %104 : vector<8x1xf32>
      %106 = vector.broadcast %105 : vector<8x1xf32> to vector<8x32xf32>
      %107 = arith.subf %99, %106 : vector<8x32xf32>
      %108 = arith.mulf %107, %107 : vector<8x32xf32>
      %cst_64 = arith.constant dense<0.000000e+00> : vector<8xf32>
      %109 = vector.multi_reduction <add>, %108, %cst_64 [1] : vector<8x32xf32> to vector<8xf32>
      %110 = vector.shape_cast %109 : vector<8xf32> to vector<8x1xf32>
      %cst_65 = arith.constant 3.200000e+01 : f32
      %111 = vector.broadcast %cst_65 : f32 to vector<8x1xf32>
      %112 = arith.divf %110, %111 : vector<8x1xf32>
      %cst_66 = arith.constant 9.99999996E-13 : f32
      %113 = vector.broadcast %cst_66 : f32 to vector<8x1xf32>
      %114 = arith.addf %112, %113 : vector<8x1xf32>
      %115 = math.sqrt %114 : vector<8x1xf32>
      %116 = vector.broadcast %115 : vector<8x1xf32> to vector<8x32xf32>
      %117 = arith.divf %107, %116 : vector<8x32xf32>
      %118 = vector.broadcast %100 : vector<1x32xf32> to vector<8x32xf32>
      %119 = arith.mulf %118, %117 : vector<8x32xf32>
      %120 = vector.broadcast %101 : vector<1x32xf32> to vector<8x32xf32>
      %121 = arith.addf %119, %120 : vector<8x32xf32>
      %c0_67 = arith.constant 0 : index
      %c0_68 = arith.constant 0 : index
      %122 = vector.load %arg18[%c0_67, %c0_68] : memref<8x32xf32, #tpu.memory_space<vmem>>, vector<8x32xf32>
      tpu.vector_store %arg18[%c0_67, %c0_68], %121 {strides = array<i32>} : memref<8x32xf32, #tpu.memory_space<vmem>>, vector<8x32xf32>,
    } else {
    }
    %c0 = arith.constant 0 : index
    %c0_1 = arith.constant 0 : index
    %3 = vector.load %arg18[%c0, %c0_1] : memref<8x32xf32, #tpu.memory_space<vmem>>, vector<8x32xf32>
    %c0_2 = arith.constant 0 : index
    %c0_3 = arith.constant 0 : index
    %4 = vector.load %arg3[%c0_2, %c0_3] : memref<16x8xbf16, #tpu.memory_space<vmem>>, vector<16x8xbf16>
    %5 = arith.truncf %3 : vector<8x32xf32> to vector<8x32xbf16>
    %cst = arith.constant dense<0.000000e+00> : vector<16x32xf32>
    %6 = tpu.matmul %4, %5, %cst {dimension_numbers = #tpu.dot_dimension_numbers<[1], [0], [0], [1], [0, 0, 1, 1], [], []>} : vector<16x8xbf16>, vector<8x32xbf16>, vector<16x32xf32> -> vector<16x32xf32>
    %7 = vector.extract_strided_slice %6 {offsets = [0, 0], sizes = [8, 32], strides = [1, 1]} : vector<16x32xf32> to vector<8x32xf32>
    %8 = vector.extract_strided_slice %6 {offsets = [8, 0], sizes = [8, 32], strides = [1, 1]} : vector<16x32xf32> to vector<8x32xf32>
    %c0_4 = arith.constant 0 : index
    %c0_5 = arith.constant 0 : index
    %c0_6 = arith.constant 0 : index
    %9 = vector.load %arg7[%c0_4, %c0_5, %c0_6] : memref<1x8x32xf32, #tpu.memory_space<vmem>>, vector<1x8x32xf32>
    %10 = vector.shape_cast %9 : vector<1x8x32xf32> to vector<8x32xf32>
    %c0_7 = arith.constant 0 : index
    %c0_8 = arith.constant 0 : index
    %c0_9 = arith.constant 0 : index
    %11 = vector.load %arg8[%c0_7, %c0_8, %c0_9] : memref<1x8x32xf32, #tpu.memory_space<vmem>>, vector<1x8x32xf32>
    %12 = vector.shape_cast %11 : vector<1x8x32xf32> to vector<8x32xf32>
    %13 = arith.mulf %7, %10 : vector<8x32xf32>
    %14 = arith.mulf %8, %12 : vector<8x32xf32>
    %15 = arith.subf %13, %14 : vector<8x32xf32>
    %16 = arith.mulf %7, %12 : vector<8x32xf32>
    %17 = arith.mulf %8, %10 : vector<8x32xf32>
    %18 = arith.addf %16, %17 : vector<8x32xf32>
    %19 = tpu.concatenate %15, %18 in 0 : vector<8x32xf32>, vector<8x32xf32> -> vector<16x32xf32>
    %20 = arith.truncf %19 : vector<16x32xf32> to vector<16x32xbf16>
    %c0_10 = arith.constant 0 : index
    %c0_11 = arith.constant 0 : index
    %21 = vector.load %arg4[%c0_10, %c0_11] : memref<8x16xbf16, #tpu.memory_space<vmem>>, vector<8x16xbf16>
    %cst_12 = arith.constant dense<0.000000e+00> : vector<8x32xf32>
    %22 = tpu.matmul %21, %20, %cst_12 {dimension_numbers = #tpu.dot_dimension_numbers<[1], [0], [0], [1], [0, 0, 1, 1], [], []>} : vector<8x16xbf16>, vector<16x32xbf16>, vector<8x32xf32> -> vector<8x32xf32>
    %23 = arith.addf %22, %3 : vector<8x32xf32>
    %c0_13 = arith.constant 0 : index
    %c0_14 = arith.constant 0 : index
    %c0_15 = arith.constant 0 : index
    %24 = vector.load %arg9[%c0_13, %c0_14, %c0_15] : memref<1x1x32xf32, #tpu.memory_space<vmem>>, vector<1x1x32xf32>
    %25 = vector.shape_cast %24 : vector<1x1x32xf32> to vector<1x32xf32>
    %c0_16 = arith.constant 0 : index
    %c0_17 = arith.constant 0 : index
    %c0_18 = arith.constant 0 : index
    %26 = vector.load %arg10[%c0_16, %c0_17, %c0_18] : memref<1x1x32xf32, #tpu.memory_space<vmem>>, vector<1x1x32xf32>
    %27 = vector.shape_cast %26 : vector<1x1x32xf32> to vector<1x32xf32>
    %cst_19 = arith.constant dense<0.000000e+00> : vector<8xf32>
    %28 = vector.multi_reduction <add>, %23, %cst_19 [1] : vector<8x32xf32> to vector<8xf32>
    %29 = vector.shape_cast %28 : vector<8xf32> to vector<8x1xf32>
    %cst_20 = arith.constant 3.200000e+01 : f32
    %30 = vector.broadcast %cst_20 : f32 to vector<8x1xf32>
    %31 = arith.divf %29, %30 : vector<8x1xf32>
    %32 = vector.broadcast %31 : vector<8x1xf32> to vector<8x32xf32>
    %33 = arith.subf %23, %32 : vector<8x32xf32>
    %34 = arith.mulf %33, %33 : vector<8x32xf32>
    %cst_21 = arith.constant dense<0.000000e+00> : vector<8xf32>
    %35 = vector.multi_reduction <add>, %34, %cst_21 [1] : vector<8x32xf32> to vector<8xf32>
    %36 = vector.shape_cast %35 : vector<8xf32> to vector<8x1xf32>
    %cst_22 = arith.constant 3.200000e+01 : f32
    %37 = vector.broadcast %cst_22 : f32 to vector<8x1xf32>
    %38 = arith.divf %36, %37 : vector<8x1xf32>
    %cst_23 = arith.constant 9.99999996E-13 : f32
    %39 = vector.broadcast %cst_23 : f32 to vector<8x1xf32>
    %40 = arith.addf %38, %39 : vector<8x1xf32>
    %41 = math.sqrt %40 : vector<8x1xf32>
    %42 = vector.broadcast %41 : vector<8x1xf32> to vector<8x32xf32>
    %43 = arith.divf %33, %42 : vector<8x32xf32>
    %44 = vector.broadcast %25 : vector<1x32xf32> to vector<8x32xf32>
    %45 = arith.mulf %44, %43 : vector<8x32xf32>
    %46 = vector.broadcast %27 : vector<1x32xf32> to vector<8x32xf32>
    %47 = arith.addf %45, %46 : vector<8x32xf32>
    %48 = arith.truncf %47 : vector<8x32xf32> to vector<8x32xbf16>
    %c0_24 = arith.constant 0 : index
    %c0_25 = arith.constant 0 : index
    %c0_26 = arith.constant 0 : index
    %49 = vector.load %arg11[%c0_24, %c0_25, %c0_26] : memref<1x32x128xbf16, #tpu.memory_space<vmem>>, vector<1x32x128xbf16>
    %50 = vector.shape_cast %49 : vector<1x32x128xbf16> to vector<32x128xbf16>
    %cst_27 = arith.constant dense<0.000000e+00> : vector<8x128xf32>
    %51 = tpu.matmul %48, %50, %cst_27 {dimension_numbers = #tpu.dot_dimension_numbers<[1], [0], [0], [1], [0, 0, 1, 1], [], []>} : vector<8x32xbf16>, vector<32x128xbf16>, vector<8x128xf32> -> vector<8x128xf32>
    %c0_28 = arith.constant 0 : index
    %c0_29 = arith.constant 0 : index
    %c0_30 = arith.constant 0 : index
    %52 = vector.load %arg12[%c0_28, %c0_29, %c0_30] : memref<1x1x128xf32, #tpu.memory_space<vmem>>, vector<1x1x128xf32>
    %53 = vector.shape_cast %52 : vector<1x1x128xf32> to vector<1x128xf32>
    %54 = vector.broadcast %53 : vector<1x128xf32> to vector<8x128xf32>
    %55 = arith.addf %51, %54 : vector<8x128xf32>
    %cst_31 = arith.constant 5.000000e-01 : f32
    %56 = vector.broadcast %cst_31 : f32 to vector<8x128xf32>
    %57 = arith.mulf %55, %56 : vector<8x128xf32>
    %cst_32 = arith.constant 1.41421354 : f32
    %58 = vector.broadcast %cst_32 : f32 to vector<8x128xf32>
    %59 = arith.divf %55, %58 : vector<8x128xf32>
    %60 = math.erf %59 : vector<8x128xf32>
    %cst_33 = arith.constant 1.000000e+00 : f32
    %61 = vector.broadcast %cst_33 : f32 to vector<8x128xf32>
    %62 = arith.addf %61, %60 : vector<8x128xf32>
    %63 = arith.mulf %57, %62 : vector<8x128xf32>
    %64 = arith.truncf %63 : vector<8x128xf32> to vector<8x128xbf16>
    %c0_34 = arith.constant 0 : index
    %c0_35 = arith.constant 0 : index
    %c0_36 = arith.constant 0 : index
    %65 = vector.load %arg13[%c0_34, %c0_35, %c0_36] : memref<1x128x32xbf16, #tpu.memory_space<vmem>>, vector<1x128x32xbf16>
    %66 = vector.shape_cast %65 : vector<1x128x32xbf16> to vector<128x32xbf16>
    %cst_37 = arith.constant dense<0.000000e+00> : vector<8x32xf32>
    %67 = tpu.matmul %64, %66, %cst_37 {dimension_numbers = #tpu.dot_dimension_numbers<[1], [0], [0], [1], [0, 0, 1, 1], [], []>} : vector<8x128xbf16>, vector<128x32xbf16>, vector<8x32xf32> -> vector<8x32xf32>
    %c0_38 = arith.constant 0 : index
    %c0_39 = arith.constant 0 : index
    %c0_40 = arith.constant 0 : index
    %68 = vector.load %arg14[%c0_38, %c0_39, %c0_40] : memref<1x1x32xf32, #tpu.memory_space<vmem>>, vector<1x1x32xf32>
    %69 = vector.shape_cast %68 : vector<1x1x32xf32> to vector<1x32xf32>
    %70 = vector.broadcast %69 : vector<1x32xf32> to vector<8x32xf32>
    %71 = arith.addf %67, %70 : vector<8x32xf32>
    %72 = arith.addf %71, %47 : vector<8x32xf32>
    %c0_41 = arith.constant 0 : index
    %c0_42 = arith.constant 0 : index
    %c0_43 = arith.constant 0 : index
    %73 = vector.load %arg15[%c0_41, %c0_42, %c0_43] : memref<1x1x32xf32, #tpu.memory_space<vmem>>, vector<1x1x32xf32>
    %74 = vector.shape_cast %73 : vector<1x1x32xf32> to vector<1x32xf32>
    %c0_44 = arith.constant 0 : index
    %c0_45 = arith.constant 0 : index
    %c0_46 = arith.constant 0 : index
    %75 = vector.load %arg16[%c0_44, %c0_45, %c0_46] : memref<1x1x32xf32, #tpu.memory_space<vmem>>, vector<1x1x32xf32>
    %76 = vector.shape_cast %75 : vector<1x1x32xf32> to vector<1x32xf32>
    %cst_47 = arith.constant dense<0.000000e+00> : vector<8xf32>
    %77 = vector.multi_reduction <add>, %72, %cst_47 [1] : vector<8x32xf32> to vector<8xf32>
    %78 = vector.shape_cast %77 : vector<8xf32> to vector<8x1xf32>
    %cst_48 = arith.constant 3.200000e+01 : f32
    %79 = vector.broadcast %cst_48 : f32 to vector<8x1xf32>
    %80 = arith.divf %78, %79 : vector<8x1xf32>
    %81 = vector.broadcast %80 : vector<8x1xf32> to vector<8x32xf32>
    %82 = arith.subf %72, %81 : vector<8x32xf32>
    %83 = arith.mulf %82, %82 : vector<8x32xf32>
    %cst_49 = arith.constant dense<0.000000e+00> : vector<8xf32>
    %84 = vector.multi_reduction <add>, %83, %cst_49 [1] : vector<8x32xf32> to vector<8xf32>
    %85 = vector.shape_cast %84 : vector<8xf32> to vector<8x1xf32>
    %cst_50 = arith.constant 3.200000e+01 : f32
    %86 = vector.broadcast %cst_50 : f32 to vector<8x1xf32>
    %87 = arith.divf %85, %86 : vector<8x1xf32>
    %cst_51 = arith.constant 9.99999996E-13 : f32
    %88 = vector.broadcast %cst_51 : f32 to vector<8x1xf32>
    %89 = arith.addf %87, %88 : vector<8x1xf32>
    %90 = math.sqrt %89 : vector<8x1xf32>
    %91 = vector.broadcast %90 : vector<8x1xf32> to vector<8x32xf32>
    %92 = arith.divf %82, %91 : vector<8x32xf32>
    %93 = vector.broadcast %74 : vector<1x32xf32> to vector<8x32xf32>
    %94 = arith.mulf %93, %92 : vector<8x32xf32>
    %95 = vector.broadcast %76 : vector<1x32xf32> to vector<8x32xf32>
    %96 = arith.addf %94, %95 : vector<8x32xf32>
    %c0_52 = arith.constant 0 : index
    %c0_53 = arith.constant 0 : index
    %97 = vector.load %arg18[%c0_52, %c0_53] : memref<8x32xf32, #tpu.memory_space<vmem>>, vector<8x32xf32>
    tpu.vector_store %arg18[%c0_52, %c0_53], %96 {strides = array<i32>} : memref<8x32xf32, #tpu.memory_space<vmem>>, vector<8x32xf32>,
    %c0_54 = arith.constant 0 : index
    %c0_55 = arith.constant 0 : index
    %98 = vector.load %arg17[%c0_54, %c0_55] : memref<8x32xf32, #tpu.memory_space<vmem>>, vector<8x32xf32>
    tpu.vector_store %arg17[%c0_54, %c0_55], %96 {strides = array<i32>} : memref<8x32xf32, #tpu.memory_space<vmem>>, vector<8x32xf32>,
    return
  }
  func.func @transform_0(%arg0: i32, %arg1: i32) -> (i32, i32) {
    %c0_i32 = arith.constant 0 : i32
    %c0_i32_0 = arith.constant 0 : i32
    return %arg0, %c0_i32 : i32, i32
  }
  func.func @transform_1(%arg0: i32, %arg1: i32) -> (i32, i32) {
    %c0_i32 = arith.constant 0 : i32
    %c0_i32_0 = arith.constant 0 : i32
    %c0_i32_1 = arith.constant 0 : i32
    return %c0_i32, %c0_i32_0 : i32, i32
  }
  func.func @transform_2(%arg0: i32, %arg1: i32) -> (i32, i32) {
    %c0_i32 = arith.constant 0 : i32
    %c0_i32_0 = arith.constant 0 : i32
    %c0_i32_1 = arith.constant 0 : i32
    return %c0_i32, %c0_i32_0 : i32, i32
  }
  func.func @transform_3(%arg0: i32, %arg1: i32) -> (i32, i32) {
    %c0_i32 = arith.constant 0 : i32
    %c0_i32_0 = arith.constant 0 : i32
    %c0_i32_1 = arith.constant 0 : i32
    return %c0_i32, %c0_i32_0 : i32, i32
  }
  func.func @transform_4(%arg0: i32, %arg1: i32) -> (i32, i32) {
    %c0_i32 = arith.constant 0 : i32
    %c0_i32_0 = arith.constant 0 : i32
    %c0_i32_1 = arith.constant 0 : i32
    return %c0_i32, %c0_i32_0 : i32, i32
  }
  func.func @transform_5(%arg0: i32, %arg1: i32) -> (i32, i32, i32) {
    %c0_i32 = arith.constant 0 : i32
    %c0_i32_0 = arith.constant 0 : i32
    %c0_i32_1 = arith.constant 0 : i32
    return %arg1, %c0_i32, %c0_i32_0 : i32, i32, i32
  }
  func.func @transform_6(%arg0: i32, %arg1: i32) -> (i32, i32, i32) {
    %c0_i32 = arith.constant 0 : i32
    %c0_i32_0 = arith.constant 0 : i32
    %c0_i32_1 = arith.constant 0 : i32
    return %arg1, %c0_i32, %c0_i32_0 : i32, i32, i32
  }
  func.func @transform_7(%arg0: i32, %arg1: i32) -> (i32, i32, i32) {
    %c0_i32 = arith.constant 0 : i32
    %c0_i32_0 = arith.constant 0 : i32
    %c0_i32_1 = arith.constant 0 : i32
    return %arg1, %c0_i32, %c0_i32_0 : i32, i32, i32
  }
  func.func @transform_8(%arg0: i32, %arg1: i32) -> (i32, i32, i32) {
    %c0_i32 = arith.constant 0 : i32
    %c0_i32_0 = arith.constant 0 : i32
    %c0_i32_1 = arith.constant 0 : i32
    return %arg1, %c0_i32, %c0_i32_0 : i32, i32, i32
  }
  func.func @transform_9(%arg0: i32, %arg1: i32) -> (i32, i32, i32) {
    %c0_i32 = arith.constant 0 : i32
    %c0_i32_0 = arith.constant 0 : i32
    %c0_i32_1 = arith.constant 0 : i32
    return %arg1, %c0_i32, %c0_i32_0 : i32, i32, i32
  }
  func.func @transform_10(%arg0: i32, %arg1: i32) -> (i32, i32, i32) {
    %c0_i32 = arith.constant 0 : i32
    %c0_i32_0 = arith.constant 0 : i32
    %c0_i32_1 = arith.constant 0 : i32
    return %arg1, %c0_i32, %c0_i32_0 : i32, i32, i32
  }
  func.func @transform_11(%arg0: i32, %arg1: i32) -> (i32, i32, i32) {
    %c0_i32 = arith.constant 0 : i32
    %c0_i32_0 = arith.constant 0 : i32
    %c0_i32_1 = arith.constant 0 : i32
    return %arg1, %c0_i32, %c0_i32_0 : i32, i32, i32
  }
  func.func @transform_12(%arg0: i32, %arg1: i32) -> (i32, i32, i32) {
    %c0_i32 = arith.constant 0 : i32
    %c0_i32_0 = arith.constant 0 : i32
    %c0_i32_1 = arith.constant 0 : i32
    return %arg1, %c0_i32, %c0_i32_0 : i32, i32, i32
  }
  func.func @transform_13(%arg0: i32, %arg1: i32) -> (i32, i32, i32) {
    %c0_i32 = arith.constant 0 : i32
    %c0_i32_0 = arith.constant 0 : i32
    %c0_i32_1 = arith.constant 0 : i32
    return %arg1, %c0_i32, %c0_i32_0 : i32, i32, i32
  }
  func.func @transform_14(%arg0: i32, %arg1: i32) -> (i32, i32, i32) {
    %c0_i32 = arith.constant 0 : i32
    %c0_i32_0 = arith.constant 0 : i32
    %c0_i32_1 = arith.constant 0 : i32
    return %arg1, %c0_i32, %c0_i32_0 : i32, i32, i32
  }
  func.func @transform_15(%arg0: i32, %arg1: i32) -> (i32, i32) {
    %c0_i32 = arith.constant 0 : i32
    %c0_i32_0 = arith.constant 0 : i32
    return %arg0, %c0_i32 : i32, i32
  }
}

</mosaic_0001>

<llo_original>
// kernel: fmlp_forward.1
$region0: #{fmlp_forward.1}
  #allocation0 [shape = 'u32[]', space=smem, size = 0x4, offset = 0x4, fixed_abs, tag = 'smem constant byte address 0x4 - core index']
  #allocation1 [shape = 'u32[144,128]{1,0:T(1,128)}', space=vmem, size = 0x12000, scoped, tag = 'internal scratch']
  #allocation2 [shape = 'f32[8,32]{1,0:T(8,128)}', space=vmem, size = 0x1000, scoped, tag = 'scratch operand']
  %s0 = inlined_call_operand.vmem [shape: f32[16,32], index: 0, kind: input, shape index: {}]
  %s1 = inlined_call_operand.vmem [shape: bf16[16,8], index: 1, kind: input, shape index: {}]
  %s2 = inlined_call_operand.vmem [shape: bf16[8,16], index: 2, kind: input, shape index: {}]
  %s3 = inlined_call_operand.vmem [shape: f32[1,32], index: 3, kind: input, shape index: {}]
  %s4 = inlined_call_operand.vmem [shape: f32[1,32], index: 4, kind: input, shape index: {}]
  %s5 = inlined_call_operand.vmem [shape: f32[2,8,32], index: 5, kind: input, shape index: {}]
  %s6 = inlined_call_operand.vmem [shape: f32[2,8,32], index: 6, kind: input, shape index: {}]
  %s7 = inlined_call_operand.vmem [shape: f32[2,1,32], index: 7, kind: input, shape index: {}]
  %s8 = inlined_call_operand.vmem [shape: f32[2,1,32], index: 8, kind: input, shape index: {}]
  %s9 = inlined_call_operand.vmem [shape: bf16[2,32,128], index: 9, kind: input, shape index: {}]
  %s10 = inlined_call_operand.vmem [shape: f32[2,1,128], index: 10, kind: input, shape index: {}]
  %s11 = inlined_call_operand.vmem [shape: bf16[2,128,32], index: 11, kind: input, shape index: {}]
  %s12 = inlined_call_operand.vmem [shape: f32[2,1,32], index: 12, kind: input, shape index: {}]
  %s13 = inlined_call_operand.vmem [shape: f32[2,1,32], index: 13, kind: input, shape index: {}]
  %s14 = inlined_call_operand.vmem [shape: f32[2,1,32], index: 14, kind: input, shape index: {}]
  %s15 = inlined_call_operand.hbm [shape: f32[16,32], index: 15, kind: output, shape index: {}]
  %s16 = sld [smem:[#allocation0]]
  $region97: #{fmlp_forward.1} parent=0
    _
  %s18 = ssub.s32 1, %s16
  %s19 = scalar_select 0, %s18, %s16
  $region1: #{fmlp_forward.1} parent=0
    #allocation3 [shape = 'u8[8192]{0}', space=vmem, size = 0x2000, scoped, tag = 'output window, operand 0']
    #allocation4 [shape = 's32[2]{0}', space=sflag, size = 0x8, scoped, tag = 'scoped memory for fmlp_forward.1']
    %20 = vsyncpa [#allocation4], 0
    %s21 = scalar_lea.sflag [#allocation4], 1
    %22 = vsyncpa %s21, 0
    loop: start=0, step=1, limit=6
    $region2: #{fmlp_forward.1} parent=1 // loop_pre_header
      _
    $region3: #{fmlp_forward.1} parent=1 // loop_header
      %s24 = sphi 0, %s28
      %p25 = scmp.ge.s32.totalorder %s24, 6
      %s31 = sphi 0, %s43
      %s32 = sphi 0, %s39
      %s33 = sphi 0, %s31
      %s34 = sphi 0, %s32
      %s35 = sphi 0, %s33
      %s36 = sphi 0, %s34
      %s46 = sphi 0, %s48
      %s49 = sphi 0, %s46
      %s50 = sphi 0, %s49
      %s66 = sphi 0, %s50
      %s70 = sphi 0, %s70
      %s72 = sphi 0, %s70
      %s73 = sphi 0, %s72
      %s87 = sphi 0, %s73
      %s91 = sphi 0, %s91
      %s93 = sphi 0, %s91
      %s94 = sphi 0, %s93
      %s108 = sphi 0, %s94
      %s112 = sphi 0, %s112
      %s114 = sphi 0, %s112
      %s115 = sphi 0, %s114
      %s129 = sphi 0, %s115
      %s133 = sphi 0, %s133
      %s135 = sphi 0, %s133
      %s136 = sphi 0, %s135
      %s150 = sphi 0, %s136
      %s156 = sphi 0, %s158
      %s159 = sphi 0, %s156
      %s160 = sphi 0, %s159
      %s176 = sphi 0, %s160
      %s182 = sphi 0, %s184
      %s185 = sphi 0, %s182
      %s186 = sphi 0, %s185
      %s202 = sphi 0, %s186
      %s208 = sphi 0, %s210
      %s211 = sphi 0, %s208
      %s212 = sphi 0, %s211
      %s228 = sphi 0, %s212
      %s234 = sphi 0, %s236
      %s237 = sphi 0, %s234
      %s238 = sphi 0, %s237
      %s254 = sphi 0, %s238
      %s260 = sphi 0, %s262
      %s263 = sphi 0, %s260
      %s264 = sphi 0, %s263
      %s280 = sphi 0, %s264
      %s286 = sphi 0, %s288
      %s289 = sphi 0, %s286
      %s290 = sphi 0, %s289
      %s306 = sphi 0, %s290
      %s312 = sphi 0, %s314
      %s315 = sphi 0, %s312
      %s316 = sphi 0, %s315
      %s332 = sphi 0, %s316
      %s338 = sphi 0, %s340
      %s341 = sphi 0, %s338
      %s342 = sphi 0, %s341
      %s358 = sphi 0, %s342
      %s364 = sphi 0, %s366
      %s367 = sphi 0, %s364
      %s368 = sphi 0, %s367
      %s384 = sphi 0, %s368
      %s390 = sphi 0, %s392
      %s393 = sphi 0, %s390
      %s394 = sphi 0, %s393
      %s410 = sphi 0, %s394
      %s416 = sphi 0, %s418
      %s419 = sphi 0, %s416
      %s420 = sphi 0, %s419
      %s436 = sphi 0, %s420
    $region4: #{fmlp_forward.1} parent=1 // loop_header_branch
      %27 = sbr.rel (%p25) target = $region8
    $region5: #{fmlp_forward.1} parent=1 // loop_body
      %s29 = ssub.s32 %s24, 1
      %s30 = ssub.s32 %s24, 2
      %s37 = sadd.s32 1, %s32
      %p38 = scmp.ge.s32.totalorder %s37, 2
      %s39 = scalar_select %p38, 0, %s37
      %s40 = sadd.s32 1, %s31
      %s41 = scalar_select %p38, %s40, %s31
      %p42 = scmp.ge.s32.totalorder %s41, 2
      %s43 = scalar_select %p42, 0, %s41
      %s44 = ssub.s32 %s31, %s43
      %p45 = scmp.eq.s32.totalorder %s44, 0
      %s47 = sadd.s32 %s46, 1
      %s48 = scalar_select %p45, %s46, %s47
      %p51 = pneg %p45
      %p52 = scmp.eq.s32.totalorder %s24, 3
      %p53 = por %p51, %p52
      %p54 = scmp.ne.s32.totalorder %s46, %s49
      %p55 = scmp.eq.s32.totalorder %s24, 0
      %p56 = por %p54, %p55
      %p57 = scmp.ne.s32.totalorder %s46, %s49
      %p58 = scmp.eq.s32.totalorder %s29, 3
      %p59 = por %p57, %p58
      %p60 = scmp.ne.s32.totalorder %s49, %s50
      %p61 = scmp.eq.s32.totalorder %s29, 0
      %p62 = por %p60, %p61
      %p63 = scmp.ne.s32.totalorder %s49, %s50
      %p64 = scmp.eq.s32.totalorder %s30, 3
      %p65 = por %p63, %p64
      %p67 = scmp.ne.s32.totalorder %s50, %s66
      %p68 = scmp.eq.s32.totalorder %s30, 0
      %p69 = por %p67, %p68
      %s71 = sadd.s32 %s70, 1
      %p74 = scmp.eq.s32.totalorder %s24, 3
      %p75 = scmp.ne.s32.totalorder %s70, %s72
      %p76 = scmp.eq.s32.totalorder %s24, 0
      %p77 = por %p75, %p76
      %p78 = scmp.ne.s32.totalorder %s70, %s72
      %p79 = scmp.eq.s32.totalorder %s29, 3
      %p80 = por %p78, %p79
      %p81 = scmp.ne.s32.totalorder %s72, %s73
      %p82 = scmp.eq.s32.totalorder %s29, 0
      %p83 = por %p81, %p82
      %p84 = scmp.ne.s32.totalorder %s72, %s73
      %p85 = scmp.eq.s32.totalorder %s30, 3
      %p86 = por %p84, %p85
      %p88 = scmp.ne.s32.totalorder %s73, %s87
      %p89 = scmp.eq.s32.totalorder %s30, 0
      %p90 = por %p88, %p89
      %s92 = sadd.s32 %s91, 1
      %p95 = scmp.eq.s32.totalorder %s24, 3
      %p96 = scmp.ne.s32.totalorder %s91, %s93
      %p97 = scmp.eq.s32.totalorder %s24, 0
      %p98 = por %p96, %p97
      %p99 = scmp.ne.s32.totalorder %s91, %s93
      %p100 = scmp.eq.s32.totalorder %s29, 3
      %p101 = por %p99, %p100
      %p102 = scmp.ne.s32.totalorder %s93, %s94
      %p103 = scmp.eq.s32.totalorder %s29, 0
      %p104 = por %p102, %p103
      %p105 = scmp.ne.s32.totalorder %s93, %s94
      %p106 = scmp.eq.s32.totalorder %s30, 3
      %p107 = por %p105, %p106
      %p109 = scmp.ne.s32.totalorder %s94, %s108
      %p110 = scmp.eq.s32.totalorder %s30, 0
      %p111 = por %p109, %p110
      %s113 = sadd.s32 %s112, 1
      %p116 = scmp.eq.s32.totalorder %s24, 3
      %p117 = scmp.ne.s32.totalorder %s112, %s114
      %p118 = scmp.eq.s32.totalorder %s24, 0
      %p119 = por %p117, %p118
      %p120 = scmp.ne.s32.totalorder %s112, %s114
      %p121 = scmp.eq.s32.totalorder %s29, 3
      %p122 = por %p120, %p121
      %p123 = scmp.ne.s32.totalorder %s114, %s115
      %p124 = scmp.eq.s32.totalorder %s29, 0
      %p125 = por %p123, %p124
      %p126 = scmp.ne.s32.totalorder %s114, %s115
      %p127 = scmp.eq.s32.totalorder %s30, 3
      %p128 = por %p126, %p127
      %p130 = scmp.ne.s32.totalorder %s115, %s129
      %p131 = scmp.eq.s32.totalorder %s30, 0
      %p132 = por %p130, %p131
      %s134 = sadd.s32 %s133, 1
      %p137 = scmp.eq.s32.totalorder %s24, 3
      %p138 = scmp.ne.s32.totalorder %s133, %s135
      %p139 = scmp.eq.s32.totalorder %s24, 0
      %p140 = por %p138, %p139
      %p141 = scmp.ne.s32.totalorder %s133, %s135
      %p142 = scmp.eq.s32.totalorder %s29, 3
      %p143 = por %p141, %p142
      %p144 = scmp.ne.s32.totalorder %s135, %s136
      %p145 = scmp.eq.s32.totalorder %s29, 0
      %p146 = por %p144, %p145
      %p147 = scmp.ne.s32.totalorder %s135, %s136
      %p148 = scmp.eq.s32.totalorder %s30, 3
      %p149 = por %p147, %p148
      %p151 = scmp.ne.s32.totalorder %s136, %s150
      %p152 = scmp.eq.s32.totalorder %s30, 0
      %p153 = por %p151, %p152
      %s154 = ssub.s32 %s32, %s39
      %p155 = scmp.eq.s32.totalorder %s154, 0
      %s157 = sadd.s32 %s156, 1
      %s158 = scalar_select %p155, %s156, %s157
      %p161 = pneg %p155
      %p162 = scmp.eq.s32.totalorder %s24, 3
      %p163 = por %p161, %p162
      %p164 = scmp.ne.s32.totalorder %s156, %s159
      %p165 = scmp.eq.s32.totalorder %s24, 0
      %p166 = por %p164, %p165
      %p167 = scmp.ne.s32.totalorder %s156, %s159
      %p168 = scmp.eq.s32.totalorder %s29, 3
      %p169 = por %p167, %p168
      %p170 = scmp.ne.s32.totalorder %s159, %s160
      %p171 = scmp.eq.s32.totalorder %s29, 0
      %p172 = por %p170, %p171
      %p173 = scmp.ne.s32.totalorder %s159, %s160
      %p174 = scmp.eq.s32.totalorder %s30, 3
      %p175 = por %p173, %p174
      %p177 = scmp.ne.s32.totalorder %s160, %s176
      %p178 = scmp.eq.s32.totalorder %s30, 0
      %p179 = por %p177, %p178
      %s180 = ssub.s32 %s32, %s39
      %p181 = scmp.eq.s32.totalorder %s180, 0
      %s183 = sadd.s32 %s182, 1
      %s184 = scalar_select %p181, %s182, %s183
      %p187 = pneg %p181
      %p188 = scmp.eq.s32.totalorder %s24, 3
      %p189 = por %p187, %p188
      %p190 = scmp.ne.s32.totalorder %s182, %s185
      %p191 = scmp.eq.s32.totalorder %s24, 0
      %p192 = por %p190, %p191
      %p193 = scmp.ne.s32.totalorder %s182, %s185
      %p194 = scmp.eq.s32.totalorder %s29, 3
      %p195 = por %p193, %p194
      %p196 = scmp.ne.s32.totalorder %s185, %s186
      %p197 = scmp.eq.s32.totalorder %s29, 0
      %p198 = por %p196, %p197
      %p199 = scmp.ne.s32.totalorder %s185, %s186
      %p200 = scmp.eq.s32.totalorder %s30, 3
      %p201 = por %p199, %p200
      %p203 = scmp.ne.s32.totalorder %s186, %s202
      %p204 = scmp.eq.s32.totalorder %s30, 0
      %p205 = por %p203, %p204
      %s206 = ssub.s32 %s32, %s39
      %p207 = scmp.eq.s32.totalorder %s206, 0
      %s209 = sadd.s32 %s208, 1
      %s210 = scalar_select %p207, %s208, %s209
      %p213 = pneg %p207
      %p214 = scmp.eq.s32.totalorder %s24, 3
      %p215 = por %p213, %p214
      %p216 = scmp.ne.s32.totalorder %s208, %s211
      %p217 = scmp.eq.s32.totalorder %s24, 0
      %p218 = por %p216, %p217
      %p219 = scmp.ne.s32.totalorder %s208, %s211
      %p220 = scmp.eq.s32.totalorder %s29, 3
      %p221 = por %p219, %p220
      %p222 = scmp.ne.s32.totalorder %s211, %s212
      %p223 = scmp.eq.s32.totalorder %s29, 0
      %p224 = por %p222, %p223
      %p225 = scmp.ne.s32.totalorder %s211, %s212
      %p226 = scmp.eq.s32.totalorder %s30, 3
      %p227 = por %p225, %p226
      %p229 = scmp.ne.s32.totalorder %s212, %s228
      %p230 = scmp.eq.s32.totalorder %s30, 0
      %p231 = por %p229, %p230
      %s232 = ssub.s32 %s32, %s39
      %p233 = scmp.eq.s32.totalorder %s232, 0
      %s235 = sadd.s32 %s234, 1
      %s236 = scalar_select %p233, %s234, %s235
      %p239 = pneg %p233
      %p240 = scmp.eq.s32.totalorder %s24, 3
      %p241 = por %p239, %p240
      %p242 = scmp.ne.s32.totalorder %s234, %s237
      %p243 = scmp.eq.s32.totalorder %s24, 0
      %p244 = por %p242, %p243
      %p245 = scmp.ne.s32.totalorder %s234, %s237
      %p246 = scmp.eq.s32.totalorder %s29, 3
      %p247 = por %p245, %p246
      %p248 = scmp.ne.s32.totalorder %s237, %s238
      %p249 = scmp.eq.s32.totalorder %s29, 0
      %p250 = por %p248, %p249
      %p251 = scmp.ne.s32.totalorder %s237, %s238
      %p252 = scmp.eq.s32.totalorder %s30, 3
      %p253 = por %p251, %p252
      %p255 = scmp.ne.s32.totalorder %s238, %s254
      %p256 = scmp.eq.s32.totalorder %s30, 0
      %p257 = por %p255, %p256
      %s258 = ssub.s32 %s32, %s39
      %p259 = scmp.eq.s32.totalorder %s258, 0
      %s261 = sadd.s32 %s260, 1
      %s262 = scalar_select %p259, %s260, %s261
      %p265 = pneg %p259
      %p266 = scmp.eq.s32.totalorder %s24, 3
      %p267 = por %p265, %p266
      %p268 = scmp.ne.s32.totalorder %s260, %s263
      %p269 = scmp.eq.s32.totalorder %s24, 0
      %p270 = por %p268, %p269
      %p271 = scmp.ne.s32.totalorder %s260, %s263
      %p272 = scmp.eq.s32.totalorder %s29, 3
      %p273 = por %p271, %p272
      %p274 = scmp.ne.s32.totalorder %s263, %s264
      %p275 = scmp.eq.s32.totalorder %s29, 0
      %p276 = por %p274, %p275
      %p277 = scmp.ne.s32.totalorder %s263, %s264
      %p278 = scmp.eq.s32.totalorder %s30, 3
      %p279 = por %p277, %p278
      %p281 = scmp.ne.s32.totalorder %s264, %s280
      %p282 = scmp.eq.s32.totalorder %s30, 0
      %p283 = por %p281, %p282
      %s284 = ssub.s32 %s32, %s39
      %p285 = scmp.eq.s32.totalorder %s284, 0
      %s287 = sadd.s32 %s286, 1
      %s288 = scalar_select %p285, %s286, %s287
      %p291 = pneg %p285
      %p292 = scmp.eq.s32.totalorder %s24, 3
      %p293 = por %p291, %p292
      %p294 = scmp.ne.s32.totalorder %s286, %s289
      %p295 = scmp.eq.s32.totalorder %s24, 0
      %p296 = por %p294, %p295
      %p297 = scmp.ne.s32.totalorder %s286, %s289
      %p298 = scmp.eq.s32.totalorder %s29, 3
      %p299 = por %p297, %p298
      %p300 = scmp.ne.s32.totalorder %s289, %s290
      %p301 = scmp.eq.s32.totalorder %s29, 0
      %p302 = por %p300, %p301
      %p303 = scmp.ne.s32.totalorder %s289, %s290
      %p304 = scmp.eq.s32.totalorder %s30, 3
      %p305 = por %p303, %p304
      %p307 = scmp.ne.s32.totalorder %s290, %s306
      %p308 = scmp.eq.s32.totalorder %s30, 0
      %p309 = por %p307, %p308
      %s310 = ssub.s32 %s32, %s39
      %p311 = scmp.eq.s32.totalorder %s310, 0
      %s313 = sadd.s32 %s312, 1
      %s314 = scalar_select %p311, %s312, %s313
      %p317 = pneg %p311
      %p318 = scmp.eq.s32.totalorder %s24, 3
      %p319 = por %p317, %p318
      %p320 = scmp.ne.s32.totalorder %s312, %s315
      %p321 = scmp.eq.s32.totalorder %s24, 0
      %p322 = por %p320, %p321
      %p323 = scmp.ne.s32.totalorder %s312, %s315
      %p324 = scmp.eq.s32.totalorder %s29, 3
      %p325 = por %p323, %p324
      %p326 = scmp.ne.s32.totalorder %s315, %s316
      %p327 = scmp.eq.s32.totalorder %s29, 0
      %p328 = por %p326, %p327
      %p329 = scmp.ne.s32.totalorder %s315, %s316
      %p330 = scmp.eq.s32.totalorder %s30, 3
      %p331 = por %p329, %p330
      %p333 = scmp.ne.s32.totalorder %s316, %s332
      %p334 = scmp.eq.s32.totalorder %s30, 0
      %p335 = por %p333, %p334
      %s336 = ssub.s32 %s32, %s39
      %p337 = scmp.eq.s32.totalorder %s336, 0
      %s339 = sadd.s32 %s338, 1
      %s340 = scalar_select %p337, %s338, %s339
      %p343 = pneg %p337
      %p344 = scmp.eq.s32.totalorder %s24, 3
      %p345 = por %p343, %p344
      %p346 = scmp.ne.s32.totalorder %s338, %s341
      %p347 = scmp.eq.s32.totalorder %s24, 0
      %p348 = por %p346, %p347
      %p349 = scmp.ne.s32.totalorder %s338, %s341
      %p350 = scmp.eq.s32.totalorder %s29, 3
      %p351 = por %p349, %p350
      %p352 = scmp.ne.s32.totalorder %s341, %s342
      %p353 = scmp.eq.s32.totalorder %s29, 0
      %p354 = por %p352, %p353
      %p355 = scmp.ne.s32.totalorder %s341, %s342
      %p356 = scmp.eq.s32.totalorder %s30, 3
      %p357 = por %p355, %p356
      %p359 = scmp.ne.s32.totalorder %s342, %s358
      %p360 = scmp.eq.s32.totalorder %s30, 0
      %p361 = por %p359, %p360
      %s362 = ssub.s32 %s32, %s39
      %p363 = scmp.eq.s32.totalorder %s362, 0
      %s365 = sadd.s32 %s364, 1
      %s366 = scalar_select %p363, %s364, %s365
      %p369 = pneg %p363
      %p370 = scmp.eq.s32.totalorder %s24, 3
      %p371 = por %p369, %p370
      %p372 = scmp.ne.s32.totalorder %s364, %s367
      %p373 = scmp.eq.s32.totalorder %s24, 0
      %p374 = por %p372, %p373
      %p375 = scmp.ne.s32.totalorder %s364, %s367
      %p376 = scmp.eq.s32.totalorder %s29, 3
      %p377 = por %p375, %p376
      %p378 = scmp.ne.s32.totalorder %s367, %s368
      %p379 = scmp.eq.s32.totalorder %s29, 0
      %p380 = por %p378, %p379
      %p381 = scmp.ne.s32.totalorder %s367, %s368
      %p382 = scmp.eq.s32.totalorder %s30, 3
      %p383 = por %p381, %p382
      %p385 = scmp.ne.s32.totalorder %s368, %s384
      %p386 = scmp.eq.s32.totalorder %s30, 0
      %p387 = por %p385, %p386
      %s388 = ssub.s32 %s32, %s39
      %p389 = scmp.eq.s32.totalorder %s388, 0
      %s391 = sadd.s32 %s390, 1
      %s392 = scalar_select %p389, %s390, %s391
      %p395 = pneg %p389
      %p396 = scmp.eq.s32.totalorder %s24, 3
      %p397 = por %p395, %p396
      %p398 = scmp.ne.s32.totalorder %s390, %s393
      %p399 = scmp.eq.s32.totalorder %s24, 0
      %p400 = por %p398, %p399
      %p401 = scmp.ne.s32.totalorder %s390, %s393
      %p402 = scmp.eq.s32.totalorder %s29, 3
      %p403 = por %p401, %p402
      %p404 = scmp.ne.s32.totalorder %s393, %s394
      %p405 = scmp.eq.s32.totalorder %s29, 0
      %p406 = por %p404, %p405
      %p407 = scmp.ne.s32.totalorder %s393, %s394
      %p408 = scmp.eq.s32.totalorder %s30, 3
      %p409 = por %p407, %p408
      %p411 = scmp.ne.s32.totalorder %s394, %s410
      %p412 = scmp.eq.s32.totalorder %s30, 0
      %p413 = por %p411, %p412
      %s414 = ssub.s32 %s31, %s43
      %p415 = scmp.eq.s32.totalorder %s414, 0
      %s417 = sadd.s32 %s416, 1
      %s418 = scalar_select %p415, %s416, %s417
      %p421 = pneg %p415
      %p422 = scmp.eq.s32.totalorder %s24, 3
      %p423 = por %p421, %p422
      %p424 = scmp.ne.s32.totalorder %s416, %s419
      %p425 = scmp.eq.s32.totalorder %s24, 0
      %p426 = por %p424, %p425
      %p427 = scmp.ne.s32.totalorder %s416, %s419
      %p428 = scmp.eq.s32.totalorder %s29, 3
      %p429 = por %p427, %p428
      %p430 = scmp.ne.s32.totalorder %s419, %s420
      %p431 = scmp.eq.s32.totalorder %s29, 0
      %p432 = por %p430, %p431
      %p433 = scmp.ne.s32.totalorder %s419, %s420
      %p434 = scmp.eq.s32.totalorder %s30, 3
      %p435 = por %p433, %p434
      %p437 = scmp.ne.s32.totalorder %s420, %s436
      %p438 = scmp.eq.s32.totalorder %s30, 0
      %p439 = por %p437, %p438
      %p440 = scmp.le.s32.totalorder 1, %s24
      %p441 = scmp.lt.s32.totalorder %s24, 5
      %p442 = pnand %p440, %p441
      %p443 = pneg %p442
      // Predicated region
      $region9: #{fmlp_forward.1} parent=5 // pred_check
        _
      $region10: #{fmlp_forward.1} parent=5 // pred_check_branch
        %445 = sbr.rel (%p442) target = $region12
      $region11: #{fmlp_forward.1} parent=5 // pred_region
        %s446 = ssub.s32 %s24, 1
        // Predicated region
        $region13: #{fmlp_forward.1} parent=11 // pred_check
          %p447 = pneg %p83
        $region14: #{fmlp_forward.1} parent=11 // pred_check_branch
          %449 = sbr.rel (%p447) target = $region16
        $region15: #{fmlp_forward.1} parent=11 // pred_region
          _
        $region16: #{fmlp_forward.1} parent=11 // pred_fallthru
          _
        // Predicated region
        $region17: #{fmlp_forward.1} parent=11 // pred_check
          %p450 = pneg %p104
        $region18: #{fmlp_forward.1} parent=11 // pred_check_branch
          %452 = sbr.rel (%p450) target = $region20
        $region19: #{fmlp_forward.1} parent=11 // pred_region
          _
        $region20: #{fmlp_forward.1} parent=11 // pred_fallthru
          _
        // Predicated region
        $region21: #{fmlp_forward.1} parent=11 // pred_check
          %p453 = pneg %p125
        $region22: #{fmlp_forward.1} parent=11 // pred_check_branch
          %455 = sbr.rel (%p453) target = $region24
        $region23: #{fmlp_forward.1} parent=11 // pred_region
          _
        $region24: #{fmlp_forward.1} parent=11 // pred_fallthru
          _
        // Predicated region
        $region25: #{fmlp_forward.1} parent=11 // pred_check
          %p456 = pneg %p146
        $region26: #{fmlp_forward.1} parent=11 // pred_check_branch
          %458 = sbr.rel (%p456) target = $region28
        $region27: #{fmlp_forward.1} parent=11 // pred_region
          _
        $region28: #{fmlp_forward.1} parent=11 // pred_fallthru
          _
      $region12: #{fmlp_forward.1} parent=5 // pred_fallthru
        _
      %p459 = scmp.lt.s32.totalorder %s24, 4
      // Predicated region
      $region29: #{fmlp_forward.1} parent=5 // pred_check
        %p460 = pneg %p459
      $region30: #{fmlp_forward.1} parent=5 // pred_check_branch
        %462 = sbr.rel (%p460) target = $region32
      $region31: #{fmlp_forward.1} parent=5 // pred_region
        // Predicated region
        $region33: #{fmlp_forward.1} parent=31 // pred_check
          %p463 = pneg %p56
        $region34: #{fmlp_forward.1} parent=31 // pred_check_branch
          %465 = sbr.rel (%p463) target = $region36
        $region35: #{fmlp_forward.1} parent=31 // pred_region
          %p466 = scmp.lt.s32.totalorder %s31, 1
          %s467 = scalar_select %p466, %s31, 1
          %s468 = smul.addr %s467, 8
          %s469 = scalar_lea.vmem %s0, %s468
        $region36: #{fmlp_forward.1} parent=31 // pred_fallthru
          _
        // Predicated region
        $region37: #{fmlp_forward.1} parent=31 // pred_check
          %p470 = pneg %p166
        $region38: #{fmlp_forward.1} parent=31 // pred_check_branch
          %472 = sbr.rel (%p470) target = $region40
        $region39: #{fmlp_forward.1} parent=31 // pred_region
          %p473 = scmp.lt.s32.totalorder %s32, 1
          %s474 = scalar_select %p473, %s32, 1
          %s475 = smul.addr %s474, 8
          %s476 = scalar_lea.vmem %s5, %s475
        $region40: #{fmlp_forward.1} parent=31 // pred_fallthru
          _
        // Predicated region
        $region41: #{fmlp_forward.1} parent=31 // pred_check
          %p477 = pneg %p192
        $region42: #{fmlp_forward.1} parent=31 // pred_check_branch
          %479 = sbr.rel (%p477) target = $region44
        $region43: #{fmlp_forward.1} parent=31 // pred_region
          %p480 = scmp.lt.s32.totalorder %s32, 1
          %s481 = scalar_select %p480, %s32, 1
          %s482 = smul.addr %s481, 8
          %s483 = scalar_lea.vmem %s6, %s482
        $region44: #{fmlp_forward.1} parent=31 // pred_fallthru
          _
        // Predicated region
        $region45: #{fmlp_forward.1} parent=31 // pred_check
          %p484 = pneg %p218
        $region46: #{fmlp_forward.1} parent=31 // pred_check_branch
          %486 = sbr.rel (%p484) target = $region48
        $region47: #{fmlp_forward.1} parent=31 // pred_region
          %p487 = scmp.lt.s32.totalorder %s32, 1
          %s488 = scalar_select %p487, %s32, 1
          %s489 = scalar_lea.vmem %s7, %s488
        $region48: #{fmlp_forward.1} parent=31 // pred_fallthru
          _
        // Predicated region
        $region49: #{fmlp_forward.1} parent=31 // pred_check
          %p490 = pneg %p244
        $region50: #{fmlp_forward.1} parent=31 // pred_check_branch
          %492 = sbr.rel (%p490) target = $region52
        $region51: #{fmlp_forward.1} parent=31 // pred_region
          %p493 = scmp.lt.s32.totalorder %s32, 1
          %s494 = scalar_select %p493, %s32, 1
          %s495 = scalar_lea.vmem %s8, %s494
        $region52: #{fmlp_forward.1} parent=31 // pred_fallthru
          _
        // Predicated region
        $region53: #{fmlp_forward.1} parent=31 // pred_check
          %p496 = pneg %p270
        $region54: #{fmlp_forward.1} parent=31 // pred_check_branch
          %498 = sbr.rel (%p496) target = $region56
        $region55: #{fmlp_forward.1} parent=31 // pred_region
          %p499 = scmp.lt.s32.totalorder %s32, 1
          %s500 = scalar_select %p499, %s32, 1
          %s501 = smul.addr %s500, 4
          %s502 = smul.addr %s501, 4
          %s503 = scalar_lea.vmem %s9, %s502
        $region56: #{fmlp_forward.1} parent=31 // pred_fallthru
          _
        // Predicated region
        $region57: #{fmlp_forward.1} parent=31 // pred_check
          %p504 = pneg %p296
        $region58: #{fmlp_forward.1} parent=31 // pred_check_branch
          %506 = sbr.rel (%p504) target = $region60
        $region59: #{fmlp_forward.1} parent=31 // pred_region
          %p507 = scmp.lt.s32.totalorder %s32, 1
          %s508 = scalar_select %p507, %s32, 1
          %s509 = scalar_lea.vmem %s10, %s508
        $region60: #{fmlp_forward.1} parent=31 // pred_fallthru
          _
        // Predicated region
        $region61: #{fmlp_forward.1} parent=31 // pred_check
          %p510 = pneg %p322
        $region62: #{fmlp_forward.1} parent=31 // pred_check_branch
          %512 = sbr.rel (%p510) target = $region64
        $region63: #{fmlp_forward.1} parent=31 // pred_region
          %p513 = scmp.lt.s32.totalorder %s32, 1
          %s514 = scalar_select %p513, %s32, 1
          %s515 = smul.addr %s514, 16
          %s516 = smul.addr %s515, 4
          %s517 = scalar_lea.vmem %s11, %s516
        $region64: #{fmlp_forward.1} parent=31 // pred_fallthru
          _
        // Predicated region
        $region65: #{fmlp_forward.1} parent=31 // pred_check
          %p518 = pneg %p348
        $region66: #{fmlp_forward.1} parent=31 // pred_check_branch
          %520 = sbr.rel (%p518) target = $region68
        $region67: #{fmlp_forward.1} parent=31 // pred_region
          %p521 = scmp.lt.s32.totalorder %s32, 1
          %s522 = scalar_select %p521, %s32, 1
          %s523 = scalar_lea.vmem %s12, %s522
        $region68: #{fmlp_forward.1} parent=31 // pred_fallthru
          _
        // Predicated region
        $region69: #{fmlp_forward.1} parent=31 // pred_check
          %p524 = pneg %p374
        $region70: #{fmlp_forward.1} parent=31 // pred_check_branch
          %526 = sbr.rel (%p524) target = $region72
        $region71: #{fmlp_forward.1} parent=31 // pred_region
          %p527 = scmp.lt.s32.totalorder %s32, 1
          %s528 = scalar_select %p527, %s32, 1
          %s529 = scalar_lea.vmem %s13, %s528
        $region72: #{fmlp_forward.1} parent=31 // pred_fallthru
          _
        // Predicated region
        $region73: #{fmlp_forward.1} parent=31 // pred_check
          %p530 = pneg %p400
        $region74: #{fmlp_forward.1} parent=31 // pred_check_branch
          %532 = sbr.rel (%p530) target = $region76
        $region75: #{fmlp_forward.1} parent=31 // pred_region
          %p533 = scmp.lt.s32.totalorder %s32, 1
          %s534 = scalar_select %p533, %s32, 1
          %s535 = scalar_lea.vmem %s14, %s534
        $region76: #{fmlp_forward.1} parent=31 // pred_fallthru
          _
      $region32: #{fmlp_forward.1} parent=5 // pred_fallthru
        _
      %p536 = scmp.le.s32.totalorder 1, %s24
      %p537 = scmp.lt.s32.totalorder %s24, 5
      %p538 = pnand %p536, %p537
      %p539 = pneg %p538
      // Predicated region
      $region77: #{fmlp_forward.1} parent=5 // pred_check
        _
      $region78: #{fmlp_forward.1} parent=5 // pred_check_branch
        %541 = sbr.rel (%p538) target = $region80
      $region79: #{fmlp_forward.1} parent=5 // pred_region
        %s542 = ssub.s32 %s24, 1
        %p543 = scmp.lt.s32.totalorder %s33, 1
        %s544 = scalar_select %p543, %s33, 1
        %s545 = smul.addr %s544, 8
        %s546 = scalar_lea.vmem %s0, %s545
        %p547 = pneg %p62
        %p548 = pneg %p59
        %p549 = pneg %p83
        %p550 = pneg %p80
        %p551 = pneg %p104
        %p552 = pneg %p101
        %p553 = pneg %p125
        %p554 = pneg %p122
        %p555 = pneg %p146
        %p556 = pneg %p143
        %p557 = scmp.lt.s32.totalorder %s34, 1
        %s558 = scalar_select %p557, %s34, 1
        %s559 = smul.addr %s558, 8
        %s560 = scalar_lea.vmem %s5, %s559
        %p561 = pneg %p172
        %p562 = pneg %p169
        %p563 = scmp.lt.s32.totalorder %s34, 1
        %s564 = scalar_select %p563, %s34, 1
        %s565 = smul.addr %s564, 8
        %s566 = scalar_lea.vmem %s6, %s565
        %p567 = pneg %p198
        %p568 = pneg %p195
        %p569 = scmp.lt.s32.totalorder %s34, 1
        %s570 = scalar_select %p569, %s34, 1
        %s571 = scalar_lea.vmem %s7, %s570
        %p572 = pneg %p224
        %p573 = pneg %p221
        %p574 = scmp.lt.s32.totalorder %s34, 1
        %s575 = scalar_select %p574, %s34, 1
        %s576 = scalar_lea.vmem %s8, %s575
        %p577 = pneg %p250
        %p578 = pneg %p247
        %p579 = scmp.lt.s32.totalorder %s34, 1
        %s580 = scalar_select %p579, %s34, 1
        %s581 = smul.addr %s580, 4
        %s582 = smul.addr %s581, 4
        %s583 = scalar_lea.vmem %s9, %s582
        %p584 = pneg %p276
        %p585 = pneg %p273
        %p586 = scmp.lt.s32.totalorder %s34, 1
        %s587 = scalar_select %p586, %s34, 1
        %s588 = scalar_lea.vmem %s10, %s587
        %p589 = pneg %p302
        %p590 = pneg %p299
        %p591 = scmp.lt.s32.totalorder %s34, 1
        %s592 = scalar_select %p591, %s34, 1
        %s593 = smul.addr %s592, 16
        %s594 = smul.addr %s593, 4
        %s595 = scalar_lea.vmem %s11, %s594
        %p596 = pneg %p328
        %p597 = pneg %p325
        %p598 = scmp.lt.s32.totalorder %s34, 1
        %s599 = scalar_select %p598, %s34, 1
        %s600 = scalar_lea.vmem %s12, %s599
        %p601 = pneg %p354
        %p602 = pneg %p351
        %p603 = scmp.lt.s32.totalorder %s34, 1
        %s604 = scalar_select %p603, %s34, 1
        %s605 = scalar_lea.vmem %s13, %s604
        %p606 = pneg %p380
        %p607 = pneg %p377
        %p608 = scmp.lt.s32.totalorder %s34, 1
        %s609 = scalar_select %p608, %s34, 1
        %s610 = scalar_lea.vmem %s14, %s609
        %p611 = pneg %p406
        %p612 = pneg %p403
        %p613 = pneg %p432
        %p614 = pneg %p429
        %s615 = sand.u32 %s419, 1
        %s616 = scalar_lea.sflag [#allocation4], %s615
        %s617 = sand.u32 %s419, 1
        %s618 = smul.addr %s617, 8
        %s619 = scalar_lea.vmem [#allocation3], %s618
        %p620 = scmp.lt.s32.totalorder %s33, 1
        %s621 = scalar_select %p620, %s33, 1
        %s622 = smul.addr %s621, 8
        %s623 = scalar_lea.vmem %s0, %s622
        %p624 = scmp.lt.s32.totalorder %s34, 1
        %s625 = scalar_select %p624, %s34, 1
        %s626 = smul.addr %s625, 8
        %s627 = scalar_lea.vmem %s5, %s626
        %p628 = scmp.lt.s32.totalorder %s34, 1
        %s629 = scalar_select %p628, %s34, 1
        %s630 = smul.addr %s629, 8
        %s631 = scalar_lea.vmem %s6, %s630
        %p632 = scmp.lt.s32.totalorder %s34, 1
        %s633 = scalar_select %p632, %s34, 1
        %s634 = scalar_lea.vmem %s7, %s633
        %p635 = scmp.lt.s32.totalorder %s34, 1
        %s636 = scalar_select %p635, %s34, 1
        %s637 = scalar_lea.vmem %s8, %s636
        %p638 = scmp.lt.s32.totalorder %s34, 1
        %s639 = scalar_select %p638, %s34, 1
        %s640 = smul.addr %s639, 4
        %s641 = smul.addr %s640, 4
        %s642 = scalar_lea.vmem %s9, %s641
        %p643 = scmp.lt.s32.totalorder %s34, 1
        %s644 = scalar_select %p643, %s34, 1
        %s645 = scalar_lea.vmem %s10, %s644
        %p646 = scmp.lt.s32.totalorder %s34, 1
        %s647 = scalar_select %p646, %s34, 1
        %s648 = smul.addr %s647, 16
        %s649 = smul.addr %s648, 4
        %s650 = scalar_lea.vmem %s11, %s649
        %p651 = scmp.lt.s32.totalorder %s34, 1
        %s652 = scalar_select %p651, %s34, 1
        %s653 = scalar_lea.vmem %s12, %s652
        %p654 = scmp.lt.s32.totalorder %s34, 1
        %s655 = scalar_select %p654, %s34, 1
        %s656 = scalar_lea.vmem %s13, %s655
        %p657 = scmp.lt.s32.totalorder %s34, 1
        %s658 = scalar_select %p657, %s34, 1
        %s659 = scalar_lea.vmem %s14, %s658
        %p661 = scmp.eq.s32.totalorder %s34, 0
        // Predicated region
        $region81: #{fmlp_forward.1} parent=79 // pred_check
          %p662 = pneg %p661
        $region82: #{fmlp_forward.1} parent=79 // pred_check_branch
          %664 = sbr.rel (%p662) target = $region84
        $region83: #{fmlp_forward.1} parent=79 // pred_region
          %v665 = vld [vmem:[%s623] sm:$0xff]
          %v666 = vld [vmem:[%s3] sm:$0x1]
          %v667 = vld [vmem:[%s4] sm:$0x1]
          %vm668 = vcmask 261120
          %v669 = vsel %vm668, %v665, 0.0
          %670 = vadd.xlane.f32.xlu0 %v669
          %v671 = vpop.xlane.xlu0 %670
          %v672 = vrcp.pop 32.0
          %v673 = vmul.f32 %v671, %v672
          %v674 = vsub.f32 %v665, %v673
          %v675 = vmul.f32 %v674, %v674
          %v676 = vsel %vm668, %v675, 0.0
          %677 = vadd.xlane.f32.xlu0 %v676
          %v678 = vpop.xlane.xlu0 %677
          %v679 = vmul.f32 %v678, %v672
          %v680 = vadd.f32 %v679, 1e-12
          %v681 = vrsqrt.pop %v680
          %v682 = vmul.f32 %v680, %v681
          %vm683 = vcmp.eq.f32.partialorder %v680, inf
          %v684 = vsel %vm683, %v680, %v682
          %vm685 = vcmp.eq.f32.partialorder %v680, 0.0
          %v686 = vand.u32 %v680, 2147483648
          %v687 = vsel %vm685, %v686, %v684
          %v688 = vrcp.pop %v687
          %v689 = vmul.f32 %v674, %v688
          %v691 = vlaneseq
          %v692 = vshrl.u32 %v691, 7
          %v693 = vsub.s32 0, %v692
          %v694 = vrot.slane %v666, %v693
          %v696 = vmul.f32 %v694, %v689
          %v698 = vlaneseq
          %v699 = vshrl.u32 %v698, 7
          %v700 = vsub.s32 0, %v699
          %v701 = vrot.slane %v667, %v700
          %v703 = vadd.f32 %v696, %v701
          %704 = vst.msk [vmem:[#allocation2] sm:$0xff] %vm668, %v703
        $region84: #{fmlp_forward.1} parent=79 // pred_fallthru
          _
        %v705 = vld [vmem:[#allocation2] sm:$0xff]
        %v706 = vld [vmem:[%s1] sm:$0xf]
        %v707 = vld [vmem:[%s1 + $0x4] sm:$0xf]
        %v708 = vpack.c.bf16 %v705, %v705
        %v711 = vunpack.c.l.b16 %v706
        %v712 = vunpack.c.l.b16 %v707
        %v713 = vpack.c.b16 %v712, %v711
        %vm714 = vcmask 64512
        %v716 = vsel %vm714, %v713, 0
        %vm718 = vcmask 1043456
        %v720 = vsel %vm718, %v708, 0
        %722 = vmatprep.subr.bf16.mxu0 0
        %723 = vmatpush1.bf16.msra.mxu0 0
        %724 = vmatprep.subr.bf16.mxu0 0
        %725 = vmatpush1.bf16.msra.mxu0 0
        %726 = vmatprep.subr.bf16.mxu0 0
        %727 = vmatpush1.bf16.msra.mxu0 0
        %728 = vmatprep.subr.bf16.mxu0 0
        %729 = vmatpush1.bf16.msra.mxu0 0
        %730 = vmatprep.subr.bf16.mxu0 0
        %731 = vmatpush1.bf16.msra.mxu0 0
        %732 = vmatprep.subr.bf16.mxu0 0
        %733 = vmatpush1.bf16.msra.mxu0 0
        %734 = vmatprep.subr.bf16.mxu0 0
        %735 = vmatpush1.bf16.msra.mxu0 0
        %736 = vmatprep.subr.bf16.mxu0 0
        %737 = vmatpush1.bf16.msra.mxu0 %v720
        %738 = vmatprep.subr.bf16.mxu0 0
        %739 = vmatpush2.bf16.msra.mxu0 0
        %740 = vmatprep.subr.bf16.mxu0 0
        %741 = vmatpush2.bf16.msra.mxu0 0
        %742 = vmatprep.subr.bf16.mxu0 0
        %743 = vmatpush2.bf16.msra.mxu0 0
        %744 = vmatprep.subr.bf16.mxu0 0
        %745 = vmatpush2.bf16.msra.mxu0 0
        %746 = vmatprep.subr.bf16.mxu0 0
        %747 = vmatpush2.bf16.msra.mxu0 0
        %748 = vmatprep.subr.bf16.mxu0 0
        %749 = vmatpush2.bf16.msra.mxu0 0
        %750 = vmatprep.subr.bf16.mxu0 0
        %751 = vmatpush2.bf16.msra.mxu0 0
        %752 = vmatprep.subr.bf16.mxu0 0
        %753 = vmatpush2.bf16.msra.mxu0 0
        %754 = vmatprep.mubr.bf16.mxu0 0
        %755 = vmatmul.mubr.bf16.gmra.mxu0 %v716
        %v756 = vpop.f32.mrf.mxu0
        %v757 = vadd.f32 0.0, %v756
        %v758 = vpop.f32.mrf.mxu0
        %v759 = vpop.f32.mrf.mxu0
        %v760 = vadd.f32 0.0, %v759
        %v761 = vpop.f32.mrf.mxu0
        %762 = vdwg.mxu0
        %v763 = vld [vmem:[%s627] sm:$0xff]
        %v764 = vld [vmem:[%s631] sm:$0xff]
        %v765 = vmul.f32 %v757, %v763
        %v766 = vmul.f32 %v760, %v764
        %v767 = vsub.f32 %v765, %v766
        %v768 = vmul.f32 %v757, %v764
        %v769 = vmul.f32 %v760, %v763
        %v770 = vadd.f32 %v768, %v769
        %v771 = vpack.c.bf16 %v770, %v767
        %v772 = vld [vmem:[%s2] sm:$0xf]
        %vm773 = vcmask 130048
        %v775 = vsel %vm773, %v772, 0
        %777 = vmatprep.subr.bf16.mxu0 0
        %778 = vmatpush1.bf16.msra.mxu0 0
        %779 = vmatprep.subr.bf16.mxu0 0
        %780 = vmatpush1.bf16.msra.mxu0 0
        %781 = vmatprep.subr.bf16.mxu0 0
        %782 = vmatpush1.bf16.msra.mxu0 0
        %783 = vmatprep.subr.bf16.mxu0 0
        %784 = vmatpush1.bf16.msra.mxu0 0
        %785 = vmatprep.subr.bf16.mxu0 0
        %786 = vmatpush1.bf16.msra.mxu0 0
        %787 = vmatprep.subr.bf16.mxu0 0
        %788 = vmatpush1.bf16.msra.mxu0 0
        %789 = vmatprep.subr.bf16.mxu0 0
        %790 = vmatpush1.bf16.msra.mxu0 0
        %791 = vmatprep.subr.bf16.mxu0 0
        %792 = vmatpush1.bf16.msra.mxu0 %v771
        %793 = vmatprep.subr.bf16.mxu0 0
        %794 = vmatpush2.bf16.msra.mxu0 0
        %795 = vmatprep.subr.bf16.mxu0 0
        %796 = vmatpush2.bf16.msra.mxu0 0
        %797 = vmatprep.subr.bf16.mxu0 0
        %798 = vmatpush2.bf16.msra.mxu0 0
        %799 = vmatprep.subr.bf16.mxu0 0
        %800 = vmatpush2.bf16.msra.mxu0 0
        %801 = vmatprep.subr.bf16.mxu0 0
        %802 = vmatpush2.bf16.msra.mxu0 0
        %803 = vmatprep.subr.bf16.mxu0 0
        %804 = vmatpush2.bf16.msra.mxu0 0
        %805 = vmatprep.subr.bf16.mxu0 0
        %806 = vmatpush2.bf16.msra.mxu0 0
        %807 = vmatprep.subr.bf16.mxu0 0
        %808 = vmatpush2.bf16.msra.mxu0 0
        %809 = vmatprep.mubr.bf16.mxu0 0
        %810 = vmatmul.mubr.bf16.gmra.mxu0 %v775
        %v811 = vpop.f32.mrf.mxu0
        %v812 = vadd.f32 %v705, %v811
        %v813 = vpop.f32.mrf.mxu0
        %v814 = vpop.f32.mrf.mxu0
        %v815 = vpop.f32.mrf.mxu0
        %816 = vdwg.mxu0
        %v817 = vld [vmem:[%s634] sm:$0x1]
        %v818 = vld [vmem:[%s637] sm:$0x1]
        %vm819 = vcmask 261120
        %v820 = vsel %vm819, %v812, 0.0
        %821 = vadd.xlane.f32.xlu0 %v820
        %v822 = vpop.xlane.xlu0 %821
        %v823 = vrcp.pop 32.0
        %v824 = vmul.f32 %v822, %v823
        %v825 = vsub.f32 %v812, %v824
        %v826 = vmul.f32 %v825, %v825
        %v827 = vsel %vm819, %v826, 0.0
        %828 = vadd.xlane.f32.xlu0 %v827
        %v829 = vpop.xlane.xlu0 %828
        %v830 = vmul.f32 %v829, %v823
        %v831 = vadd.f32 %v830, 1e-12
        %v832 = vrsqrt.pop %v831
        %v833 = vmul.f32 %v831, %v832
        %vm834 = vcmp.eq.f32.partialorder %v831, inf
        %v835 = vsel %vm834, %v831, %v833
        %vm836 = vcmp.eq.f32.partialorder %v831, 0.0
        %v837 = vand.u32 %v831, 2147483648
        %v838 = vsel %vm836, %v837, %v835
        %v839 = vrcp.pop %v838
        %v840 = vmul.f32 %v825, %v839
        %v842 = vlaneseq
        %v843 = vshrl.u32 %v842, 7
        %v844 = vsub.s32 0, %v843
        %v845 = vrot.slane %v817, %v844
        %v847 = vmul.f32 %v845, %v840
        %v849 = vlaneseq
        %v850 = vshrl.u32 %v849, 7
        %v851 = vsub.s32 0, %v850
        %v852 = vrot.slane %v818, %v851
        %v854 = vadd.f32 %v847, %v852
        %v855 = vpack.c.bf16 %v854, %v854
        %v856 = vld [vmem:[%s642] sm:$0xf]
        %v857 = vld [vmem:[%s642 + $0x4] sm:$0xf]
        %v858 = vld [vmem:[%s642 + $0x8] sm:$0xf]
        %v859 = vld [vmem:[%s642 + $0xc] sm:$0xf]
        %v860 = vld [vmem:[%s645] sm:$0x1]
        %v862 = vlaneseq
        %v863 = vshrl.u32 %v862, 7
        %v864 = vsub.s32 0, %v863
        %v865 = vrot.slane %v860, %v864
        %v871 = vunpack.c.l.b16 %v856
        %v872 = vunpack.c.l.b16 %v857
        %v873 = vunpack.c.l.b16 %v858
        %v874 = vunpack.c.l.b16 %v859
        %v875 = vpack.c.b16 %v872, %v871
        %v876 = vpack.c.b16 %v874, %v873
        %v880 = vsel %vm819, %v855, 0
        %882 = vmatprep.subr.bf16.mxu0 0
        %883 = vmatpush1.bf16.msra.mxu0 0
        %884 = vmatprep.subr.bf16.mxu0 0
        %885 = vmatpush1.bf16.msra.mxu0 0
        %886 = vmatprep.subr.bf16.mxu0 0
        %887 = vmatpush1.bf16.msra.mxu0 0
        %888 = vmatprep.subr.bf16.mxu0 0
        %889 = vmatpush1.bf16.msra.mxu0 0
        %890 = vmatprep.subr.bf16.mxu0 0
        %891 = vmatpush1.bf16.msra.mxu0 0
        %892 = vmatprep.subr.bf16.mxu0 0
        %893 = vmatpush1.bf16.msra.mxu0 0
        %894 = vmatprep.subr.bf16.mxu0 0
        %895 = vmatpush1.bf16.msra.mxu0 %v876
        %896 = vmatprep.subr.bf16.mxu0 0
        %897 = vmatpush1.bf16.msra.mxu0 %v875
        %898 = vmatprep.subr.bf16.mxu0 0
        %899 = vmatpush2.bf16.msra.mxu0 0
        %900 = vmatprep.subr.bf16.mxu0 0
        %901 = vmatpush2.bf16.msra.mxu0 0
        %902 = vmatprep.subr.bf16.mxu0 0
        %903 = vmatpush2.bf16.msra.mxu0 0
        %904 = vmatprep.subr.bf16.mxu0 0
        %905 = vmatpush2.bf16.msra.mxu0 0
        %906 = vmatprep.subr.bf16.mxu0 0
        %907 = vmatpush2.bf16.msra.mxu0 0
        %908 = vmatprep.subr.bf16.mxu0 0
        %909 = vmatpush2.bf16.msra.mxu0 0
        %910 = vmatprep.subr.bf16.mxu0 0
        %911 = vmatpush2.bf16.msra.mxu0 0
        %912 = vmatprep.subr.bf16.mxu0 0
        %913 = vmatpush2.bf16.msra.mxu0 0
        %914 = vmatprep.mubr.bf16.mxu0 0
        %915 = vmatmul.mubr.bf16.gmra.mxu0 %v880
        %v916 = vpop.f32.mrf.mxu0
        %v917 = vadd.f32 %v865, %v916
        %v918 = vpop.f32.mrf.mxu0
        %v919 = vpop.f32.mrf.mxu0
        %v920 = vpop.f32.mrf.mxu0
        %921 = vdwg.mxu0
        %v922 = vmul.f32 %v917, 0.5
        %v923 = vrcp.pop 1.4142135
        %v924 = vmul.f32 %v917, %v923
        %v925 = verf.f32.pop %v924
        %v926 = vadd.f32 %v925, 1.0
        %v927 = vmul.f32 %v922, %v926
        %v928 = vpack.c.bf16 %v927, %v927
        %v929 = vld [vmem:[%s650] sm:$0xf]
        %v930 = vld [vmem:[%s650 + $0x4] sm:$0xf]
        %v931 = vld [vmem:[%s650 + $0x8] sm:$0xf]
        %v932 = vld [vmem:[%s650 + $0xc] sm:$0xf]
        %v933 = vld [vmem:[%s650 + $0x10] sm:$0xf]
        %v934 = vld [vmem:[%s650 + $0x14] sm:$0xf]
        %v935 = vld [vmem:[%s650 + $0x18] sm:$0xf]
        %v936 = vld [vmem:[%s650 + $0x1c] sm:$0xf]
        %v937 = vld [vmem:[%s650 + $0x20] sm:$0xf]
        %v938 = vld [vmem:[%s650 + $0x24] sm:$0xf]
        %v939 = vld [vmem:[%s650 + $0x28] sm:$0xf]
        %v940 = vld [vmem:[%s650 + $0x2c] sm:$0xf]
        %v941 = vld [vmem:[%s650 + $0x30] sm:$0xf]
        %v942 = vld [vmem:[%s650 + $0x34] sm:$0xf]
        %v943 = vld [vmem:[%s650 + $0x38] sm:$0xf]
        %v944 = vld [vmem:[%s650 + $0x3c] sm:$0xf]
        %v945 = vld [vmem:[%s653] sm:$0x1]
        %v947 = vlaneseq
        %v948 = vshrl.u32 %v947, 7
        %v949 = vsub.s32 0, %v948
        %v950 = vrot.slane %v945, %v949
        %v968 = vunpack.c.l.b16 %v929
        %v969 = vunpack.c.l.b16 %v930
        %v970 = vunpack.c.l.b16 %v931
        %v971 = vunpack.c.l.b16 %v932
        %v972 = vunpack.c.l.b16 %v933
        %v973 = vunpack.c.l.b16 %v934
        %v974 = vunpack.c.l.b16 %v935
        %v975 = vunpack.c.l.b16 %v936
        %v976 = vunpack.c.l.b16 %v937
        %v977 = vunpack.c.l.b16 %v938
        %v978 = vunpack.c.l.b16 %v939
        %v979 = vunpack.c.l.b16 %v940
        %v980 = vunpack.c.l.b16 %v941
        %v981 = vunpack.c.l.b16 %v942
        %v982 = vunpack.c.l.b16 %v943
        %v983 = vunpack.c.l.b16 %v944
        %v984 = vpack.c.b16 %v969, %v968
        %v985 = vpack.c.b16 %v971, %v970
        %v986 = vpack.c.b16 %v973, %v972
        %v987 = vpack.c.b16 %v975, %v974
        %v988 = vpack.c.b16 %v977, %v976
        %v989 = vpack.c.b16 %v979, %v978
        %v990 = vpack.c.b16 %v981, %v980
        %v991 = vpack.c.b16 %v983, %v982
        %1000 = vmatprep.subr.bf16.mxu0 0
        %1001 = vmatpush1.bf16.msra.mxu0 %v991
        %1002 = vmatprep.subr.bf16.mxu0 0
        %1003 = vmatpush1.bf16.msra.mxu0 %v990
        %1004 = vmatprep.subr.bf16.mxu0 0
        %1005 = vmatpush1.bf16.msra.mxu0 %v989
        %1006 = vmatprep.subr.bf16.mxu0 0
        %1007 = vmatpush1.bf16.msra.mxu0 %v988
        %1008 = vmatprep.subr.bf16.mxu0 0
        %1009 = vmatpush1.bf16.msra.mxu0 %v987
        %1010 = vmatprep.subr.bf16.mxu0 0
        %1011 = vmatpush1.bf16.msra.mxu0 %v986
        %1012 = vmatprep.subr.bf16.mxu0 0
        %1013 = vmatpush1.bf16.msra.mxu0 %v985
        %1014 = vmatprep.subr.bf16.mxu0 0
        %1015 = vmatpush1.bf16.msra.mxu0 %v984
        %1016 = vmatprep.subr.bf16.mxu0 0
        %1017 = vmatpush2.bf16.msra.mxu0 0
        %1018 = vmatprep.subr.bf16.mxu0 0
        %1019 = vmatpush2.bf16.msra.mxu0 0
        %1020 = vmatprep.subr.bf16.mxu0 0
        %1021 = vmatpush2.bf16.msra.mxu0 0
        %1022 = vmatprep.subr.bf16.mxu0 0
        %1023 = vmatpush2.bf16.msra.mxu0 0
        %1024 = vmatprep.subr.bf16.mxu0 0
        %1025 = vmatpush2.bf16.msra.mxu0 0
        %1026 = vmatprep.subr.bf16.mxu0 0
        %1027 = vmatpush2.bf16.msra.mxu0 0
        %1028 = vmatprep.subr.bf16.mxu0 0
        %1029 = vmatpush2.bf16.msra.mxu0 0
        %1030 = vmatprep.subr.bf16.mxu0 0
        %1031 = vmatpush2.bf16.msra.mxu0 0
        %1032 = vmatprep.mubr.bf16.mxu0 0
        %1033 = vmatmul.mubr.bf16.gmra.mxu0 %v928
        %v1034 = vpop.f32.mrf.mxu0
        %v1035 = vadd.f32 %v950, %v1034
        %v1036 = vpop.f32.mrf.mxu0
        %v1037 = vpop.f32.mrf.mxu0
        %v1038 = vpop.f32.mrf.mxu0
        %1039 = vdwg.mxu0
        %v1040 = vadd.f32 %v1035, %v854
        %v1041 = vld [vmem:[%s656] sm:$0x1]
        %v1042 = vld [vmem:[%s659] sm:$0x1]
        %v1043 = vsel %vm819, %v1040, 0.0
        %1044 = vadd.xlane.f32.xlu0 %v1043
        %v1045 = vpop.xlane.xlu0 %1044
        %v1046 = vmul.f32 %v1045, %v823
        %v1047 = vsub.f32 %v1040, %v1046
        %v1048 = vmul.f32 %v1047, %v1047
        %v1049 = vsel %vm819, %v1048, 0.0
        %1050 = vadd.xlane.f32.xlu0 %v1049
        %v1051 = vpop.xlane.xlu0 %1050
        %v1052 = vmul.f32 %v1051, %v823
        %v1053 = vadd.f32 %v1052, 1e-12
        %v1054 = vrsqrt.pop %v1053
        %v1055 = vmul.f32 %v1053, %v1054
        %vm1056 = vcmp.eq.f32.partialorder %v1053, inf
        %v1057 = vsel %vm1056, %v1053, %v1055
        %vm1058 = vcmp.eq.f32.partialorder %v1053, 0.0
        %v1059 = vand.u32 %v1053, 2147483648
        %v1060 = vsel %vm1058, %v1059, %v1057
        %v1061 = vrcp.pop %v1060
        %v1062 = vmul.f32 %v1047, %v1061
        %v1064 = vlaneseq
        %v1065 = vshrl.u32 %v1064, 7
        %v1066 = vsub.s32 0, %v1065
        %v1067 = vrot.slane %v1041, %v1066
        %v1069 = vmul.f32 %v1067, %v1062
        %v1071 = vlaneseq
        %v1072 = vshrl.u32 %v1071, 7
        %v1073 = vsub.s32 0, %v1072
        %v1074 = vrot.slane %v1042, %v1073
        %v1076 = vadd.f32 %v1069, %v1074
        %1077 = vst.msk [vmem:[#allocation2] sm:$0xff] %vm819, %v1076
        %1078 = vst.msk [vmem:[%s619] sm:$0xff] %vm819, %v1076
        %s1079 = sand.u32 %s419, 1
        %s1080 = scalar_lea.sflag [#allocation4], %s1079
        %s1081 = sand.u32 %s419, 1
        %s1082 = smul.addr %s1081, 8
        %s1083 = scalar_lea.vmem [#allocation3], %s1082
        // Predicated region
        $region85: #{fmlp_forward.1} parent=79 // pred_check
          %p1084 = pneg %p429
        $region86: #{fmlp_forward.1} parent=79 // pred_check_branch
          %1086 = sbr.rel (%p1084) target = $region88
        $region87: #{fmlp_forward.1} parent=79 // pred_region
          %s1088 = ssub.s32 128, 128
          %1089 = vsyncadd %s1080, %s1088
          %s1090 = smul.addr %s33, 128
          %s1091 = scalar_lea.hbm %s15, %s1090
          %s1093 = sshll.u32 %s1083, 4
          %s1094 = int_to_ptr.vmem [resolvable:$true] %s1093
          %1096 = dma.vmem_to_hbm [thread:$0]  %s1094, 128, %s1091, %s1080
        $region88: #{fmlp_forward.1} parent=79 // pred_fallthru
          _
      $region80: #{fmlp_forward.1} parent=5 // pred_fallthru
        _
      %p1097 = scmp.le.s32.totalorder 2, %s24
      // Predicated region
      $region89: #{fmlp_forward.1} parent=5 // pred_check
        %p1098 = pneg %p1097
      $region90: #{fmlp_forward.1} parent=5 // pred_check_branch
        %1100 = sbr.rel (%p1098) target = $region92
      $region91: #{fmlp_forward.1} parent=5 // pred_region
        %s1101 = ssub.s32 %s24, 2
        // Predicated region
        $region93: #{fmlp_forward.1} parent=91 // pred_check
          %p1102 = pneg %p435
        $region94: #{fmlp_forward.1} parent=91 // pred_check_branch
          %1104 = sbr.rel (%p1102) target = $region96
        $region95: #{fmlp_forward.1} parent=91 // pred_region
          %s1105 = sand.u32 %s420, 1
          %s1106 = scalar_lea.sflag [#allocation4], %s1105
          %s1107 = sand.u32 %s420, 1
          %s1108 = smul.addr %s1107, 8
          %s1109 = scalar_lea.vmem [#allocation3], %s1108
          %1110 = dma.done %s1106, 128
        $region96: #{fmlp_forward.1} parent=91 // pred_fallthru
          _
      $region92: #{fmlp_forward.1} parent=5 // pred_fallthru
        _
    $region6: #{fmlp_forward.1} parent=1 // loop_footer
      %s28 = sadd.s32 1, %s24
    $region7: #{fmlp_forward.1} parent=1 // loop_footer_branch
      %23 = sbr.rel target = $region3
    $region8: #{fmlp_forward.1} parent=1 // loop_exit
      _
    %1111 = vsyncpa [#allocation4], 1
    %s1112 = scalar_lea.sflag [#allocation4], 1
    %1113 = vsyncpa %s1112, 1

</llo_original>
